<compile_context>
chip_gen: v6e
topology: v6e:2x2x1
jax: 0.10.0
libtpu: 0.0.40
codegen_flags: <defaults>
</compile_context>

<pallas_src>
import functools
import math

import jax
import jax.numpy as jnp
from jax import lax
from jax.experimental import pallas as pl
from jax.experimental.pallas import tpu as pltpu


def _round_up(x: int, m: int) -> int:
    return ((x + m - 1) // m) * m


def get_embedding(num_embeddings: int, embedding_dim: int) -> jnp.ndarray:
    """Deterministic sinusoidal table, identical math to the PyTorch staticmethod."""
    half_dim = embedding_dim // 2
    scale = math.log(10000.0) / half_dim
    freqs = jnp.exp(jnp.arange(half_dim, dtype=jnp.float32) * -scale)
    args = jnp.arange(num_embeddings, dtype=jnp.float32)[:, None] * freqs[None, :]
    emb = jnp.concatenate([jnp.sin(args), jnp.cos(args)], axis=1).reshape(
        num_embeddings, -1
    )
    if embedding_dim % 2 == 1:
        emb = jnp.concatenate(
            [emb, jnp.zeros((num_embeddings, 1), dtype=jnp.float32)], axis=1
        )
    return emb


def _pos_emb_kernel(pos_ref, ok_ref, w_ref, out_ref, *, seq_tile: int):
    # pos_ref : [B, S_pad] int32, SMEM (scalar prefetch) -- precomputed positions
    # ok_ref  : [B, S_pad//8] int32, SMEM -- 1 iff the 8-token chunk has no padding
    # w_ref   : [resident_rows, D] f32, VMEM, resident across the whole grid
    # out_ref : [seq_tile, D] f32 (batch dim squeezed away by the BlockSpec)
    b = pl.program_id(0)
    s = pl.program_id(1)
    n_chunks = seq_tile // 8
    tok_base = s * seq_tile
    chunk_base = s * n_chunks

    def do_chunk(c, carry):
        t0 = pl.multiple_of(c * 8, 8)
        ok = ok_ref[b, chunk_base + c]
        p0 = pos_ref[b, tok_base + t0]

        @pl.when(ok == 1)
        def _():
            # Pad-free chunk: positions are p0..p0+7 -> one sublane-dense (8, D) copy.
            out_ref[pl.ds(t0, 8), :] = w_ref[pl.ds(p0, 8), :]

        @pl.when(ok != 1)
        def _():
            # Mixed chunk (contains padding): per-token row copies, fully unrolled.
            def tok(t, carry2):
                p = pos_ref[b, tok_base + t0 + t]
                out_ref[pl.ds(t0 + t, 1), :] = w_ref[pl.ds(p, 1), :]
                return carry2

            lax.fori_loop(0, 8, tok, 0, unroll=True)

        return carry

    lax.fori_loop(0, n_chunks, do_chunk, 0, unroll=min(8, n_chunks))


def _pick_seq_tile(seq_len: int, target: int = 512) -> int:
    """Seq tile: multiple of 8, near `target`; never the whole (huge) sequence."""
    s8 = _round_up(seq_len, 8)
    if s8 <= target:
        return s8
    for t in range(target, 127, -8):  # prefer a divisor of s8 (no seq padding needed)
        if s8 % t == 0:
            return t
    return target  # otherwise pad the sequence up to a multiple of `target`


def sinusoidal_positional_embedding(tokens: jnp.ndarray,
                                    weights: jnp.ndarray,
                                    padding_idx: int) -> jnp.ndarray:
    """tokens: [bsz, seq_len] int; weights: [num_emb, emb_dim] f32."""
    bsz, seq_len = tokens.shape
    num_emb, emb_dim = weights.shape
    if seq_len > num_emb:  # the module regrows the table when seq outgrows it
        weights = get_embedding(seq_len, emb_dim).astype(weights.dtype)
        num_emb = seq_len

    tokens = tokens.astype(jnp.int32)

    # Tiny XLA prepass: positions = (cumsum(mask) - 1) * mask  (padding -> row 0).
    mask = (tokens != padding_idx).astype(jnp.int32)
    positions = (jnp.cumsum(mask, axis=1) - 1) * mask

    # --- tiling / padding ---------------------------------------------------
    seq_tile = _pick_seq_tile(seq_len)
    padded_s = _round_up(seq_len, seq_tile)
    if padded_s != seq_len:
        pad = padded_s - seq_len
        positions = jnp.pad(positions, ((0, 0), (0, pad)))  # padded tokens -> row 0
        mask = jnp.pad(mask, ((0, 0), (0, pad)))            # padded chunks -> slow path
    num_seq_tiles = padded_s // seq_tile

    # Per-8-token "no padding" flag: fast path is one (8, D) copy per chunk.
    # TODO(synk): for very large B*S, SMEM-prefetched positions should switch to
    # per-tile VMEM blocks instead of a full [B, S] SMEM-resident array.
    chunk_ok = (mask.reshape(bsz, padded_s // 8, 8).sum(axis=-1) == 8).astype(jnp.int32)

    # positions < seq_len, so only the first round_up(seq_len, 8) table rows are
    # ever gathered -- keep just those resident in VMEM.
    resident_rows = min(num_emb, _round_up(seq_len, 8))

    # --- explicit VMEM budget (v7x 64 MiB / v5e 16 MiB default scoped limit) ---
    itemsize = jnp.dtype(weights.dtype).itemsize
    table_bytes = resident_rows * emb_dim * itemsize
    out_block_bytes = seq_tile * emb_dim * itemsize
    vmem_needed = 2 * table_bytes + 2 * out_block_bytes + (1 << 20)
    vmem_limit = int(min(max(vmem_needed, 32 << 20), 64 << 20))

    kernel = functools.partial(_pos_emb_kernel, seq_tile=seq_tile)

    def _run(weight_spec):
        return pl.pallas_call(
            kernel,
            out_shape=jax.ShapeDtypeStruct((bsz, padded_s, emb_dim), weights.dtype),
            grid_spec=pltpu.PrefetchScalarGridSpec(
                num_scalar_prefetch=2,  # positions, chunk_ok -> SMEM
                grid=(bsz, num_seq_tiles),
                in_specs=[weight_spec],
                out_specs=pl.BlockSpec(
                    (None, seq_tile, emb_dim), lambda b, s, pos, ok: (b, s, 0)
                ),
            ),
            compiler_params=pltpu.CompilerParams(
                dimension_semantics=("parallel", "parallel"),
                vmem_limit_bytes=vmem_limit,
            ),
        )(positions, chunk_ok, weights)

    try:
        # Table is never re-fetched (constant index_map): one resident buffer suffices,
        # halving its VMEM footprint.
        out = _run(
            pl.BlockSpec((resident_rows, emb_dim), lambda b, s, pos, ok: (0, 0),
                         pipeline_mode=pl.Buffered(1))
        )
    except Exception:
        # Fallback: default (double-buffered) pipeline if single-buffering is rejected.
        out = _run(pl.BlockSpec((resident_rows, emb_dim), lambda b, s, pos, ok: (0, 0)))

    if padded_s != seq_len:
        out = out[:, :seq_len, :]
    return out


def _reference(tokens, weights, padding_idx):
    mask = (tokens != padding_idx).astype(jnp.int32)
    positions = (jnp.cumsum(mask, axis=1) - 1) * mask
    return jnp.take(weights, positions.reshape(-1), axis=0).reshape(
        tokens.shape[0], tokens.shape[1], -1
    )


if __name__ == "__main__":
    # Module hyper-parameters (small, consistent with the forward pass).
    embedding_dim = 32
    padding_idx = 1
    init_size = 64          # SinusoidalPositionalEmbedding(embedding_dim, padding_idx, init_size)

    bsz, seq_len = 2, 16

    key = jax.random.PRNGKey(0)
    # Draw tokens in [2, 10) so padding only appears where we inject it, then place
    # padding in the first 8-token chunk of each row: chunk 0 exercises the per-token
    # slow path, chunk 1 exercises the (8, D) fast path.
    tokens = jax.random.randint(key, (bsz, seq_len), 2, 10, dtype=jnp.int32)
    tokens = tokens.at[0, 0].set(padding_idx).at[1, 3].set(padding_idx)

    weights = get_embedding(init_size, embedding_dim)   # deterministic "parameter" buffer

    out = sinusoidal_positional_embedding(tokens, weights, padding_idx)
    out = jax.block_until_ready(out)

    ref = _reference(tokens, weights, padding_idx)
    assert out.shape == (bsz, seq_len, embedding_dim)
    assert jnp.allclose(out, ref, atol=1e-6, rtol=1e-6), "mismatch vs reference"

    print("KERNEL_OK")
</pallas_src>

<mosaic_0001>
module attributes {stable_mosaic.version = 11 : i64} {
  func.func @_pos_emb_kernel(%arg0: i32, %arg1: i32, %arg2: memref<2x16xi32, #tpu.memory_space<smem>>, %arg3: memref<2x2xi32, #tpu.memory_space<smem>>, %arg4: memref<16x32xf32, #tpu.memory_space<vmem>>, %arg5: memref<1x16x32xf32, #tpu.memory_space<vmem>>) attributes {dimension_semantics = [#tpu.dimension_semantics<parallel>, #tpu.dimension_semantics<parallel>], iteration_bounds = array<i64: 2, 1>, scalar_prefetch = 2 : i64, scratch_operands = 0 : i64, tpu.core_type = #tpu.core_type<tc>, window_params = [{pipeline_mode = #tpu.pipeline_mode<synchronous>, transform_indices = @transform_0, window_bounds = array<i64: 16, 32>}, {transform_indices = @transform_1, window_bounds = array<i64: 1, 16, 32>}]} {
    %c16_i32 = arith.constant 16 : i32
    %0 = arith.muli %arg1, %c16_i32 : i32
    %c2_i32 = arith.constant 2 : i32
    %1 = arith.muli %arg1, %c2_i32 : i32
    %c0_i32 = arith.constant 0 : i32
    %c8_i32 = arith.constant 8 : i32
    %2 = arith.muli %c0_i32, %c8_i32 : i32
    %3 = tpu.assume_multiple %2, 8 : i32
    %4 = arith.addi %1, %c0_i32 : i32
    %5 = arith.index_cast %arg0 : i32 to index
    %6 = arith.index_cast %4 : i32 to index
    %7 = memref.load %arg3[%5, %6] : memref<2x2xi32, #tpu.memory_space<smem>>
    %8 = arith.addi %0, %3 : i32
    %9 = arith.index_cast %arg0 : i32 to index
    %10 = arith.index_cast %8 : i32 to index
    %11 = memref.load %arg2[%9, %10] : memref<2x16xi32, #tpu.memory_space<smem>>
    %c1_i32 = arith.constant 1 : i32
    %12 = arith.cmpi eq, %7, %c1_i32 : i32
    %13 = arith.extui %12 : i1 to i32
    %c0_i32_0 = arith.constant 0 : i32
    %14 = arith.cmpi ne, %13, %c0_i32_0 : i32
    scf.if %14 {
      %34 = arith.index_cast %11 : i32 to index
      %c0 = arith.constant 0 : index
      %35 = vector.load %arg4[%34, %c0] : memref<16x32xf32, #tpu.memory_space<vmem>>, vector<8x32xf32>
      %c0_10 = arith.constant 0 : index
      %36 = arith.index_cast %3 : i32 to index
      %c0_11 = arith.constant 0 : index
      %37 = vector.load %arg5[%c0_10, %36, %c0_11] : memref<1x16x32xf32, #tpu.memory_space<vmem>>, vector<1x8x32xf32>
      %38 = vector.shape_cast %37 : vector<1x8x32xf32> to vector<8x32xf32>
      %39 = vector.shape_cast %35 : vector<8x32xf32> to vector<1x8x32xf32>
      tpu.vector_store %arg5[%c0_10, %36, %c0_11], %39 {strides = array<i32>} : memref<1x16x32xf32, #tpu.memory_space<vmem>>, vector<1x8x32xf32>,
    } else {
    }
    %c1_i32_1 = arith.constant 1 : i32
    %15 = arith.cmpi ne, %7, %c1_i32_1 : i32
    %16 = arith.extui %15 : i1 to i32
    %c0_i32_2 = arith.constant 0 : i32
    %17 = arith.cmpi ne, %16, %c0_i32_2 : i32
    scf.if %17 {
      %c0_i32_10 = arith.constant 0 : i32
      %34 = arith.addi %0, %3 : i32
      %35 = arith.addi %34, %c0_i32_10 : i32
      %36 = arith.index_cast %arg0 : i32 to index
      %37 = arith.index_cast %35 : i32 to index
      %38 = memref.load %arg2[%36, %37] : memref<2x16xi32, #tpu.memory_space<smem>>
      %39 = arith.index_cast %38 : i32 to index
      %c0 = arith.constant 0 : index
      %40 = vector.load %arg4[%39, %c0] : memref<16x32xf32, #tpu.memory_space<vmem>>, vector<1x32xf32>
      %41 = arith.addi %3, %c0_i32_10 : i32
      %c0_11 = arith.constant 0 : index
      %42 = arith.index_cast %41 : i32 to index
      %c0_12 = arith.constant 0 : index
      %43 = vector.load %arg5[%c0_11, %42, %c0_12] : memref<1x16x32xf32, #tpu.memory_space<vmem>>, vector<1x1x32xf32>
      %44 = vector.shape_cast %43 : vector<1x1x32xf32> to vector<1x32xf32>
      %45 = vector.shape_cast %40 : vector<1x32xf32> to vector<1x1x32xf32>
      tpu.vector_store %arg5[%c0_11, %42, %c0_12], %45 {strides = array<i32>} : memref<1x16x32xf32, #tpu.memory_space<vmem>>, vector<1x1x32xf32>,
      %c1_i32_13 = arith.constant 1 : i32
      %46 = arith.addi %0, %3 : i32
      %47 = arith.addi %46, %c1_i32_13 : i32
      %48 = arith.index_cast %arg0 : i32 to index
      %49 = arith.index_cast %47 : i32 to index
      %50 = memref.load %arg2[%48, %49] : memref<2x16xi32, #tpu.memory_space<smem>>
      %51 = arith.index_cast %50 : i32 to index
      %c0_14 = arith.constant 0 : index
      %52 = vector.load %arg4[%51, %c0_14] : memref<16x32xf32, #tpu.memory_space<vmem>>, vector<1x32xf32>
      %53 = arith.addi %3, %c1_i32_13 : i32
      %c0_15 = arith.constant 0 : index
      %54 = arith.index_cast %53 : i32 to index
      %c0_16 = arith.constant 0 : index
      %55 = vector.load %arg5[%c0_15, %54, %c0_16] : memref<1x16x32xf32, #tpu.memory_space<vmem>>, vector<1x1x32xf32>
      %56 = vector.shape_cast %55 : vector<1x1x32xf32> to vector<1x32xf32>
      %57 = vector.shape_cast %52 : vector<1x32xf32> to vector<1x1x32xf32>
      tpu.vector_store %arg5[%c0_15, %54, %c0_16], %57 {strides = array<i32>} : memref<1x16x32xf32, #tpu.memory_space<vmem>>, vector<1x1x32xf32>,
      %c2_i32_17 = arith.constant 2 : i32
      %58 = arith.addi %0, %3 : i32
      %59 = arith.addi %58, %c2_i32_17 : i32
      %60 = arith.index_cast %arg0 : i32 to index
      %61 = arith.index_cast %59 : i32 to index
      %62 = memref.load %arg2[%60, %61] : memref<2x16xi32, #tpu.memory_space<smem>>
      %63 = arith.index_cast %62 : i32 to index
      %c0_18 = arith.constant 0 : index
      %64 = vector.load %arg4[%63, %c0_18] : memref<16x32xf32, #tpu.memory_space<vmem>>, vector<1x32xf32>
      %65 = arith.addi %3, %c2_i32_17 : i32
      %c0_19 = arith.constant 0 : index
      %66 = arith.index_cast %65 : i32 to index
      %c0_20 = arith.constant 0 : index
      %67 = vector.load %arg5[%c0_19, %66, %c0_20] : memref<1x16x32xf32, #tpu.memory_space<vmem>>, vector<1x1x32xf32>
      %68 = vector.shape_cast %67 : vector<1x1x32xf32> to vector<1x32xf32>
      %69 = vector.shape_cast %64 : vector<1x32xf32> to vector<1x1x32xf32>
      tpu.vector_store %arg5[%c0_19, %66, %c0_20], %69 {strides = array<i32>} : memref<1x16x32xf32, #tpu.memory_space<vmem>>, vector<1x1x32xf32>,
      %c3_i32 = arith.constant 3 : i32
      %70 = arith.addi %0, %3 : i32
      %71 = arith.addi %70, %c3_i32 : i32
      %72 = arith.index_cast %arg0 : i32 to index
      %73 = arith.index_cast %71 : i32 to index
      %74 = memref.load %arg2[%72, %73] : memref<2x16xi32, #tpu.memory_space<smem>>
      %75 = arith.index_cast %74 : i32 to index
      %c0_21 = arith.constant 0 : index
      %76 = vector.load %arg4[%75, %c0_21] : memref<16x32xf32, #tpu.memory_space<vmem>>, vector<1x32xf32>
      %77 = arith.addi %3, %c3_i32 : i32
      %c0_22 = arith.constant 0 : index
      %78 = arith.index_cast %77 : i32 to index
      %c0_23 = arith.constant 0 : index
      %79 = vector.load %arg5[%c0_22, %78, %c0_23] : memref<1x16x32xf32, #tpu.memory_space<vmem>>, vector<1x1x32xf32>
      %80 = vector.shape_cast %79 : vector<1x1x32xf32> to vector<1x32xf32>
      %81 = vector.shape_cast %76 : vector<1x32xf32> to vector<1x1x32xf32>
      tpu.vector_store %arg5[%c0_22, %78, %c0_23], %81 {strides = array<i32>} : memref<1x16x32xf32, #tpu.memory_space<vmem>>, vector<1x1x32xf32>,
      %c4_i32 = arith.constant 4 : i32
      %82 = arith.addi %0, %3 : i32
      %83 = arith.addi %82, %c4_i32 : i32
      %84 = arith.index_cast %arg0 : i32 to index
      %85 = arith.index_cast %83 : i32 to index
      %86 = memref.load %arg2[%84, %85] : memref<2x16xi32, #tpu.memory_space<smem>>
      %87 = arith.index_cast %86 : i32 to index
      %c0_24 = arith.constant 0 : index
      %88 = vector.load %arg4[%87, %c0_24] : memref<16x32xf32, #tpu.memory_space<vmem>>, vector<1x32xf32>
      %89 = arith.addi %3, %c4_i32 : i32
      %c0_25 = arith.constant 0 : index
      %90 = arith.index_cast %89 : i32 to index
      %c0_26 = arith.constant 0 : index
      %91 = vector.load %arg5[%c0_25, %90, %c0_26] : memref<1x16x32xf32, #tpu.memory_space<vmem>>, vector<1x1x32xf32>
      %92 = vector.shape_cast %91 : vector<1x1x32xf32> to vector<1x32xf32>
      %93 = vector.shape_cast %88 : vector<1x32xf32> to vector<1x1x32xf32>
      tpu.vector_store %arg5[%c0_25, %90, %c0_26], %93 {strides = array<i32>} : memref<1x16x32xf32, #tpu.memory_space<vmem>>, vector<1x1x32xf32>,
      %c5_i32 = arith.constant 5 : i32
      %94 = arith.addi %0, %3 : i32
      %95 = arith.addi %94, %c5_i32 : i32
      %96 = arith.index_cast %arg0 : i32 to index
      %97 = arith.index_cast %95 : i32 to index
      %98 = memref.load %arg2[%96, %97] : memref<2x16xi32, #tpu.memory_space<smem>>
      %99 = arith.index_cast %98 : i32 to index
      %c0_27 = arith.constant 0 : index
      %100 = vector.load %arg4[%99, %c0_27] : memref<16x32xf32, #tpu.memory_space<vmem>>, vector<1x32xf32>
      %101 = arith.addi %3, %c5_i32 : i32
      %c0_28 = arith.constant 0 : index
      %102 = arith.index_cast %101 : i32 to index
      %c0_29 = arith.constant 0 : index
      %103 = vector.load %arg5[%c0_28, %102, %c0_29] : memref<1x16x32xf32, #tpu.memory_space<vmem>>, vector<1x1x32xf32>
      %104 = vector.shape_cast %103 : vector<1x1x32xf32> to vector<1x32xf32>
      %105 = vector.shape_cast %100 : vector<1x32xf32> to vector<1x1x32xf32>
      tpu.vector_store %arg5[%c0_28, %102, %c0_29], %105 {strides = array<i32>} : memref<1x16x32xf32, #tpu.memory_space<vmem>>, vector<1x1x32xf32>,
      %c6_i32 = arith.constant 6 : i32
      %106 = arith.addi %0, %3 : i32
      %107 = arith.addi %106, %c6_i32 : i32
      %108 = arith.index_cast %arg0 : i32 to index
      %109 = arith.index_cast %107 : i32 to index
      %110 = memref.load %arg2[%108, %109] : memref<2x16xi32, #tpu.memory_space<smem>>
      %111 = arith.index_cast %110 : i32 to index
      %c0_30 = arith.constant 0 : index
      %112 = vector.load %arg4[%111, %c0_30] : memref<16x32xf32, #tpu.memory_space<vmem>>, vector<1x32xf32>
      %113 = arith.addi %3, %c6_i32 : i32
      %c0_31 = arith.constant 0 : index
      %114 = arith.index_cast %113 : i32 to index
      %c0_32 = arith.constant 0 : index
      %115 = vector.load %arg5[%c0_31, %114, %c0_32] : memref<1x16x32xf32, #tpu.memory_space<vmem>>, vector<1x1x32xf32>
      %116 = vector.shape_cast %115 : vector<1x1x32xf32> to vector<1x32xf32>
      %117 = vector.shape_cast %112 : vector<1x32xf32> to vector<1x1x32xf32>
      tpu.vector_store %arg5[%c0_31, %114, %c0_32], %117 {strides = array<i32>} : memref<1x16x32xf32, #tpu.memory_space<vmem>>, vector<1x1x32xf32>,
      %c7_i32 = arith.constant 7 : i32
      %118 = arith.addi %0, %3 : i32
      %119 = arith.addi %118, %c7_i32 : i32
      %120 = arith.index_cast %arg0 : i32 to index
      %121 = arith.index_cast %119 : i32 to index
      %122 = memref.load %arg2[%120, %121] : memref<2x16xi32, #tpu.memory_space<smem>>
      %123 = arith.index_cast %122 : i32 to index
      %c0_33 = arith.constant 0 : index
      %124 = vector.load %arg4[%123, %c0_33] : memref<16x32xf32, #tpu.memory_space<vmem>>, vector<1x32xf32>
      %125 = arith.addi %3, %c7_i32 : i32
      %c0_34 = arith.constant 0 : index
      %126 = arith.index_cast %125 : i32 to index
      %c0_35 = arith.constant 0 : index
      %127 = vector.load %arg5[%c0_34, %126, %c0_35] : memref<1x16x32xf32, #tpu.memory_space<vmem>>, vector<1x1x32xf32>
      %128 = vector.shape_cast %127 : vector<1x1x32xf32> to vector<1x32xf32>
      %129 = vector.shape_cast %124 : vector<1x32xf32> to vector<1x1x32xf32>
      tpu.vector_store %arg5[%c0_34, %126, %c0_35], %129 {strides = array<i32>} : memref<1x16x32xf32, #tpu.memory_space<vmem>>, vector<1x1x32xf32>,
      %c8_i32_36 = arith.constant 8 : i32
    } else {
    }
    %c1_i32_3 = arith.constant 1 : i32
    %c8_i32_4 = arith.constant 8 : i32
    %18 = arith.muli %c1_i32_3, %c8_i32_4 : i32
    %19 = tpu.assume_multiple %18, 8 : i32
    %20 = arith.addi %1, %c1_i32_3 : i32
    %21 = arith.index_cast %arg0 : i32 to index
    %22 = arith.index_cast %20 : i32 to index
    %23 = memref.load %arg3[%21, %22] : memref<2x2xi32, #tpu.memory_space<smem>>
    %24 = arith.addi %0, %19 : i32
    %25 = arith.index_cast %arg0 : i32 to index
    %26 = arith.index_cast %24 : i32 to index
    %27 = memref.load %arg2[%25, %26] : memref<2x16xi32, #tpu.memory_space<smem>>
    %c1_i32_5 = arith.constant 1 : i32
    %28 = arith.cmpi eq, %23, %c1_i32_5 : i32
    %29 = arith.extui %28 : i1 to i32
    %c0_i32_6 = arith.constant 0 : i32
    %30 = arith.cmpi ne, %29, %c0_i32_6 : i32
    scf.if %30 {
      %34 = arith.index_cast %27 : i32 to index
      %c0 = arith.constant 0 : index
      %35 = vector.load %arg4[%34, %c0] : memref<16x32xf32, #tpu.memory_space<vmem>>, vector<8x32xf32>
      %c0_10 = arith.constant 0 : index
      %36 = arith.index_cast %19 : i32 to index
      %c0_11 = arith.constant 0 : index
      %37 = vector.load %arg5[%c0_10, %36, %c0_11] : memref<1x16x32xf32, #tpu.memory_space<vmem>>, vector<1x8x32xf32>
      %38 = vector.shape_cast %37 : vector<1x8x32xf32> to vector<8x32xf32>
      %39 = vector.shape_cast %35 : vector<8x32xf32> to vector<1x8x32xf32>
      tpu.vector_store %arg5[%c0_10, %36, %c0_11], %39 {strides = array<i32>} : memref<1x16x32xf32, #tpu.memory_space<vmem>>, vector<1x8x32xf32>,
    } else {
    }
    %c1_i32_7 = arith.constant 1 : i32
    %31 = arith.cmpi ne, %23, %c1_i32_7 : i32
    %32 = arith.extui %31 : i1 to i32
    %c0_i32_8 = arith.constant 0 : i32
    %33 = arith.cmpi ne, %32, %c0_i32_8 : i32
    scf.if %33 {
      %c0_i32_10 = arith.constant 0 : i32
      %34 = arith.addi %0, %19 : i32
      %35 = arith.addi %34, %c0_i32_10 : i32
      %36 = arith.index_cast %arg0 : i32 to index
      %37 = arith.index_cast %35 : i32 to index
      %38 = memref.load %arg2[%36, %37] : memref<2x16xi32, #tpu.memory_space<smem>>
      %39 = arith.index_cast %38 : i32 to index
      %c0 = arith.constant 0 : index
      %40 = vector.load %arg4[%39, %c0] : memref<16x32xf32, #tpu.memory_space<vmem>>, vector<1x32xf32>
      %41 = arith.addi %19, %c0_i32_10 : i32
      %c0_11 = arith.constant 0 : index
      %42 = arith.index_cast %41 : i32 to index
      %c0_12 = arith.constant 0 : index
      %43 = vector.load %arg5[%c0_11, %42, %c0_12] : memref<1x16x32xf32, #tpu.memory_space<vmem>>, vector<1x1x32xf32>
      %44 = vector.shape_cast %43 : vector<1x1x32xf32> to vector<1x32xf32>
      %45 = vector.shape_cast %40 : vector<1x32xf32> to vector<1x1x32xf32>
      tpu.vector_store %arg5[%c0_11, %42, %c0_12], %45 {strides = array<i32>} : memref<1x16x32xf32, #tpu.memory_space<vmem>>, vector<1x1x32xf32>,
      %c1_i32_13 = arith.constant 1 : i32
      %46 = arith.addi %0, %19 : i32
      %47 = arith.addi %46, %c1_i32_13 : i32
      %48 = arith.index_cast %arg0 : i32 to index
      %49 = arith.index_cast %47 : i32 to index
      %50 = memref.load %arg2[%48, %49] : memref<2x16xi32, #tpu.memory_space<smem>>
      %51 = arith.index_cast %50 : i32 to index
      %c0_14 = arith.constant 0 : index
      %52 = vector.load %arg4[%51, %c0_14] : memref<16x32xf32, #tpu.memory_space<vmem>>, vector<1x32xf32>
      %53 = arith.addi %19, %c1_i32_13 : i32
      %c0_15 = arith.constant 0 : index
      %54 = arith.index_cast %53 : i32 to index
      %c0_16 = arith.constant 0 : index
      %55 = vector.load %arg5[%c0_15, %54, %c0_16] : memref<1x16x32xf32, #tpu.memory_space<vmem>>, vector<1x1x32xf32>
      %56 = vector.shape_cast %55 : vector<1x1x32xf32> to vector<1x32xf32>
      %57 = vector.shape_cast %52 : vector<1x32xf32> to vector<1x1x32xf32>
      tpu.vector_store %arg5[%c0_15, %54, %c0_16], %57 {strides = array<i32>} : memref<1x16x32xf32, #tpu.memory_space<vmem>>, vector<1x1x32xf32>,
      %c2_i32_17 = arith.constant 2 : i32
      %58 = arith.addi %0, %19 : i32
      %59 = arith.addi %58, %c2_i32_17 : i32
      %60 = arith.index_cast %arg0 : i32 to index
      %61 = arith.index_cast %59 : i32 to index
      %62 = memref.load %arg2[%60, %61] : memref<2x16xi32, #tpu.memory_space<smem>>
      %63 = arith.index_cast %62 : i32 to index
      %c0_18 = arith.constant 0 : index
      %64 = vector.load %arg4[%63, %c0_18] : memref<16x32xf32, #tpu.memory_space<vmem>>, vector<1x32xf32>
      %65 = arith.addi %19, %c2_i32_17 : i32
      %c0_19 = arith.constant 0 : index
      %66 = arith.index_cast %65 : i32 to index
      %c0_20 = arith.constant 0 : index
      %67 = vector.load %arg5[%c0_19, %66, %c0_20] : memref<1x16x32xf32, #tpu.memory_space<vmem>>, vector<1x1x32xf32>
      %68 = vector.shape_cast %67 : vector<1x1x32xf32> to vector<1x32xf32>
      %69 = vector.shape_cast %64 : vector<1x32xf32> to vector<1x1x32xf32>
      tpu.vector_store %arg5[%c0_19, %66, %c0_20], %69 {strides = array<i32>} : memref<1x16x32xf32, #tpu.memory_space<vmem>>, vector<1x1x32xf32>,
      %c3_i32 = arith.constant 3 : i32
      %70 = arith.addi %0, %19 : i32
      %71 = arith.addi %70, %c3_i32 : i32
      %72 = arith.index_cast %arg0 : i32 to index
      %73 = arith.index_cast %71 : i32 to index
      %74 = memref.load %arg2[%72, %73] : memref<2x16xi32, #tpu.memory_space<smem>>
      %75 = arith.index_cast %74 : i32 to index
      %c0_21 = arith.constant 0 : index
      %76 = vector.load %arg4[%75, %c0_21] : memref<16x32xf32, #tpu.memory_space<vmem>>, vector<1x32xf32>
      %77 = arith.addi %19, %c3_i32 : i32
      %c0_22 = arith.constant 0 : index
      %78 = arith.index_cast %77 : i32 to index
      %c0_23 = arith.constant 0 : index
      %79 = vector.load %arg5[%c0_22, %78, %c0_23] : memref<1x16x32xf32, #tpu.memory_space<vmem>>, vector<1x1x32xf32>
      %80 = vector.shape_cast %79 : vector<1x1x32xf32> to vector<1x32xf32>
      %81 = vector.shape_cast %76 : vector<1x32xf32> to vector<1x1x32xf32>
      tpu.vector_store %arg5[%c0_22, %78, %c0_23], %81 {strides = array<i32>} : memref<1x16x32xf32, #tpu.memory_space<vmem>>, vector<1x1x32xf32>,
      %c4_i32 = arith.constant 4 : i32
      %82 = arith.addi %0, %19 : i32
      %83 = arith.addi %82, %c4_i32 : i32
      %84 = arith.index_cast %arg0 : i32 to index
      %85 = arith.index_cast %83 : i32 to index
      %86 = memref.load %arg2[%84, %85] : memref<2x16xi32, #tpu.memory_space<smem>>
      %87 = arith.index_cast %86 : i32 to index
      %c0_24 = arith.constant 0 : index
      %88 = vector.load %arg4[%87, %c0_24] : memref<16x32xf32, #tpu.memory_space<vmem>>, vector<1x32xf32>
      %89 = arith.addi %19, %c4_i32 : i32
      %c0_25 = arith.constant 0 : index
      %90 = arith.index_cast %89 : i32 to index
      %c0_26 = arith.constant 0 : index
      %91 = vector.load %arg5[%c0_25, %90, %c0_26] : memref<1x16x32xf32, #tpu.memory_space<vmem>>, vector<1x1x32xf32>
      %92 = vector.shape_cast %91 : vector<1x1x32xf32> to vector<1x32xf32>
      %93 = vector.shape_cast %88 : vector<1x32xf32> to vector<1x1x32xf32>
      tpu.vector_store %arg5[%c0_25, %90, %c0_26], %93 {strides = array<i32>} : memref<1x16x32xf32, #tpu.memory_space<vmem>>, vector<1x1x32xf32>,
      %c5_i32 = arith.constant 5 : i32
      %94 = arith.addi %0, %19 : i32
      %95 = arith.addi %94, %c5_i32 : i32
      %96 = arith.index_cast %arg0 : i32 to index
      %97 = arith.index_cast %95 : i32 to index
      %98 = memref.load %arg2[%96, %97] : memref<2x16xi32, #tpu.memory_space<smem>>
      %99 = arith.index_cast %98 : i32 to index
      %c0_27 = arith.constant 0 : index
      %100 = vector.load %arg4[%99, %c0_27] : memref<16x32xf32, #tpu.memory_space<vmem>>, vector<1x32xf32>
      %101 = arith.addi %19, %c5_i32 : i32
      %c0_28 = arith.constant 0 : index
      %102 = arith.index_cast %101 : i32 to index
      %c0_29 = arith.constant 0 : index
      %103 = vector.load %arg5[%c0_28, %102, %c0_29] : memref<1x16x32xf32, #tpu.memory_space<vmem>>, vector<1x1x32xf32>
      %104 = vector.shape_cast %103 : vector<1x1x32xf32> to vector<1x32xf32>
      %105 = vector.shape_cast %100 : vector<1x32xf32> to vector<1x1x32xf32>
      tpu.vector_store %arg5[%c0_28, %102, %c0_29], %105 {strides = array<i32>} : memref<1x16x32xf32, #tpu.memory_space<vmem>>, vector<1x1x32xf32>,
      %c6_i32 = arith.constant 6 : i32
      %106 = arith.addi %0, %19 : i32
      %107 = arith.addi %106, %c6_i32 : i32
      %108 = arith.index_cast %arg0 : i32 to index
      %109 = arith.index_cast %107 : i32 to index
      %110 = memref.load %arg2[%108, %109] : memref<2x16xi32, #tpu.memory_space<smem>>
      %111 = arith.index_cast %110 : i32 to index
      %c0_30 = arith.constant 0 : index
      %112 = vector.load %arg4[%111, %c0_30] : memref<16x32xf32, #tpu.memory_space<vmem>>, vector<1x32xf32>
      %113 = arith.addi %19, %c6_i32 : i32
      %c0_31 = arith.constant 0 : index
      %114 = arith.index_cast %113 : i32 to index
      %c0_32 = arith.constant 0 : index
      %115 = vector.load %arg5[%c0_31, %114, %c0_32] : memref<1x16x32xf32, #tpu.memory_space<vmem>>, vector<1x1x32xf32>
      %116 = vector.shape_cast %115 : vector<1x1x32xf32> to vector<1x32xf32>
      %117 = vector.shape_cast %112 : vector<1x32xf32> to vector<1x1x32xf32>
      tpu.vector_store %arg5[%c0_31, %114, %c0_32], %117 {strides = array<i32>} : memref<1x16x32xf32, #tpu.memory_space<vmem>>, vector<1x1x32xf32>,
      %c7_i32 = arith.constant 7 : i32
      %118 = arith.addi %0, %19 : i32
      %119 = arith.addi %118, %c7_i32 : i32
      %120 = arith.index_cast %arg0 : i32 to index
      %121 = arith.index_cast %119 : i32 to index
      %122 = memref.load %arg2[%120, %121] : memref<2x16xi32, #tpu.memory_space<smem>>
      %123 = arith.index_cast %122 : i32 to index
      %c0_33 = arith.constant 0 : index
      %124 = vector.load %arg4[%123, %c0_33] : memref<16x32xf32, #tpu.memory_space<vmem>>, vector<1x32xf32>
      %125 = arith.addi %19, %c7_i32 : i32
      %c0_34 = arith.constant 0 : index
      %126 = arith.index_cast %125 : i32 to index
      %c0_35 = arith.constant 0 : index
      %127 = vector.load %arg5[%c0_34, %126, %c0_35] : memref<1x16x32xf32, #tpu.memory_space<vmem>>, vector<1x1x32xf32>
      %128 = vector.shape_cast %127 : vector<1x1x32xf32> to vector<1x32xf32>
      %129 = vector.shape_cast %124 : vector<1x32xf32> to vector<1x1x32xf32>
      tpu.vector_store %arg5[%c0_34, %126, %c0_35], %129 {strides = array<i32>} : memref<1x16x32xf32, #tpu.memory_space<vmem>>, vector<1x1x32xf32>,
      %c8_i32_36 = arith.constant 8 : i32
    } else {
    }
    %c2_i32_9 = arith.constant 2 : i32
    return
  }
  func.func @transform_0(%arg0: i32, %arg1: i32, %arg2: memref<2x16xi32, #tpu.memory_space<smem>>, %arg3: memref<2x2xi32, #tpu.memory_space<smem>>) -> (i32, i32) {
    %c0_i32 = arith.constant 0 : i32
    %c0_i32_0 = arith.constant 0 : i32
    %c0_i32_1 = arith.constant 0 : i32
    return %c0_i32, %c0_i32_0 : i32, i32
  }
  func.func @transform_1(%arg0: i32, %arg1: i32, %arg2: memref<2x16xi32, #tpu.memory_space<smem>>, %arg3: memref<2x2xi32, #tpu.memory_space<smem>>) -> (i32, i32, i32) {
    %c0_i32 = arith.constant 0 : i32
    %c0_i32_0 = arith.constant 0 : i32
    return %arg0, %arg1, %c0_i32 : i32, i32, i32
  }
}

module attributes {stable_mosaic.version = 11 : i64} {
  func.func @_pos_emb_kernel(%arg0: i32, %arg1: i32, %arg2: memref<2x16xi32, #tpu.memory_space<smem>>, %arg3: memref<2x2xi32, #tpu.memory_space<smem>>, %arg4: memref<16x32xf32, #tpu.memory_space<vmem>>, %arg5: memref<1x16x32xf32, #tpu.memory_space<vmem>>) attributes {dimension_semantics = [#tpu.dimension_semantics<parallel>, #tpu.dimension_semantics<parallel>], iteration_bounds = array<i64: 2, 1>, scalar_prefetch = 2 : i64, scratch_operands = 0 : i64, tpu.core_type = #tpu.core_type<tc>, window_params = [{transform_indices = @transform_0, window_bounds = array<i64: 16, 32>}, {transform_indices = @transform_1, window_bounds = array<i64: 1, 16, 32>}]} {
    %c16_i32 = arith.constant 16 : i32
    %0 = arith.muli %arg1, %c16_i32 : i32
    %c2_i32 = arith.constant 2 : i32
    %1 = arith.muli %arg1, %c2_i32 : i32
    %c0_i32 = arith.constant 0 : i32
    %c8_i32 = arith.constant 8 : i32
    %2 = arith.muli %c0_i32, %c8_i32 : i32
    %3 = tpu.assume_multiple %2, 8 : i32
    %4 = arith.addi %1, %c0_i32 : i32
    %5 = arith.index_cast %arg0 : i32 to index
    %6 = arith.index_cast %4 : i32 to index
    %7 = memref.load %arg3[%5, %6] : memref<2x2xi32, #tpu.memory_space<smem>>
    %8 = arith.addi %0, %3 : i32
    %9 = arith.index_cast %arg0 : i32 to index
    %10 = arith.index_cast %8 : i32 to index
    %11 = memref.load %arg2[%9, %10] : memref<2x16xi32, #tpu.memory_space<smem>>
    %c1_i32 = arith.constant 1 : i32
    %12 = arith.cmpi eq, %7, %c1_i32 : i32
    %13 = arith.extui %12 : i1 to i32
    %c0_i32_0 = arith.constant 0 : i32
    %14 = arith.cmpi ne, %13, %c0_i32_0 : i32
    scf.if %14 {
      %34 = arith.index_cast %11 : i32 to index
      %c0 = arith.constant 0 : index
      %35 = vector.load %arg4[%34, %c0] : memref<16x32xf32, #tpu.memory_space<vmem>>, vector<8x32xf32>
      %c0_10 = arith.constant 0 : index
      %36 = arith.index_cast %3 : i32 to index
      %c0_11 = arith.constant 0 : index
      %37 = vector.load %arg5[%c0_10, %36, %c0_11] : memref<1x16x32xf32, #tpu.memory_space<vmem>>, vector<1x8x32xf32>
      %38 = vector.shape_cast %37 : vector<1x8x32xf32> to vector<8x32xf32>
      %39 = vector.shape_cast %35 : vector<8x32xf32> to vector<1x8x32xf32>
      tpu.vector_store %arg5[%c0_10, %36, %c0_11], %39 {strides = array<i32>} : memref<1x16x32xf32, #tpu.memory_space<vmem>>, vector<1x8x32xf32>,
    } else {
    }
    %c1_i32_1 = arith.constant 1 : i32
    %15 = arith.cmpi ne, %7, %c1_i32_1 : i32
    %16 = arith.extui %15 : i1 to i32
    %c0_i32_2 = arith.constant 0 : i32
    %17 = arith.cmpi ne, %16, %c0_i32_2 : i32
    scf.if %17 {
      %c0_i32_10 = arith.constant 0 : i32
      %34 = arith.addi %0, %3 : i32
      %35 = arith.addi %34, %c0_i32_10 : i32
      %36 = arith.index_cast %arg0 : i32 to index
      %37 = arith.index_cast %35 : i32 to index
      %38 = memref.load %arg2[%36, %37] : memref<2x16xi32, #tpu.memory_space<smem>>
      %39 = arith.index_cast %38 : i32 to index
      %c0 = arith.constant 0 : index
      %40 = vector.load %arg4[%39, %c0] : memref<16x32xf32, #tpu.memory_space<vmem>>, vector<1x32xf32>
      %41 = arith.addi %3, %c0_i32_10 : i32
      %c0_11 = arith.constant 0 : index
      %42 = arith.index_cast %41 : i32 to index
      %c0_12 = arith.constant 0 : index
      %43 = vector.load %arg5[%c0_11, %42, %c0_12] : memref<1x16x32xf32, #tpu.memory_space<vmem>>, vector<1x1x32xf32>
      %44 = vector.shape_cast %43 : vector<1x1x32xf32> to vector<1x32xf32>
      %45 = vector.shape_cast %40 : vector<1x32xf32> to vector<1x1x32xf32>
      tpu.vector_store %arg5[%c0_11, %42, %c0_12], %45 {strides = array<i32>} : memref<1x16x32xf32, #tpu.memory_space<vmem>>, vector<1x1x32xf32>,
      %c1_i32_13 = arith.constant 1 : i32
      %46 = arith.addi %0, %3 : i32
      %47 = arith.addi %46, %c1_i32_13 : i32
      %48 = arith.index_cast %arg0 : i32 to index
      %49 = arith.index_cast %47 : i32 to index
      %50 = memref.load %arg2[%48, %49] : memref<2x16xi32, #tpu.memory_space<smem>>
      %51 = arith.index_cast %50 : i32 to index
      %c0_14 = arith.constant 0 : index
      %52 = vector.load %arg4[%51, %c0_14] : memref<16x32xf32, #tpu.memory_space<vmem>>, vector<1x32xf32>
      %53 = arith.addi %3, %c1_i32_13 : i32
      %c0_15 = arith.constant 0 : index
      %54 = arith.index_cast %53 : i32 to index
      %c0_16 = arith.constant 0 : index
      %55 = vector.load %arg5[%c0_15, %54, %c0_16] : memref<1x16x32xf32, #tpu.memory_space<vmem>>, vector<1x1x32xf32>
      %56 = vector.shape_cast %55 : vector<1x1x32xf32> to vector<1x32xf32>
      %57 = vector.shape_cast %52 : vector<1x32xf32> to vector<1x1x32xf32>
      tpu.vector_store %arg5[%c0_15, %54, %c0_16], %57 {strides = array<i32>} : memref<1x16x32xf32, #tpu.memory_space<vmem>>, vector<1x1x32xf32>,
      %c2_i32_17 = arith.constant 2 : i32
      %58 = arith.addi %0, %3 : i32
      %59 = arith.addi %58, %c2_i32_17 : i32
      %60 = arith.index_cast %arg0 : i32 to index
      %61 = arith.index_cast %59 : i32 to index
      %62 = memref.load %arg2[%60, %61] : memref<2x16xi32, #tpu.memory_space<smem>>
      %63 = arith.index_cast %62 : i32 to index
      %c0_18 = arith.constant 0 : index
      %64 = vector.load %arg4[%63, %c0_18] : memref<16x32xf32, #tpu.memory_space<vmem>>, vector<1x32xf32>
      %65 = arith.addi %3, %c2_i32_17 : i32
      %c0_19 = arith.constant 0 : index
      %66 = arith.index_cast %65 : i32 to index
      %c0_20 = arith.constant 0 : index
      %67 = vector.load %arg5[%c0_19, %66, %c0_20] : memref<1x16x32xf32, #tpu.memory_space<vmem>>, vector<1x1x32xf32>
      %68 = vector.shape_cast %67 : vector<1x1x32xf32> to vector<1x32xf32>
      %69 = vector.shape_cast %64 : vector<1x32xf32> to vector<1x1x32xf32>
      tpu.vector_store %arg5[%c0_19, %66, %c0_20], %69 {strides = array<i32>} : memref<1x16x32xf32, #tpu.memory_space<vmem>>, vector<1x1x32xf32>,
      %c3_i32 = arith.constant 3 : i32
      %70 = arith.addi %0, %3 : i32
      %71 = arith.addi %70, %c3_i32 : i32
      %72 = arith.index_cast %arg0 : i32 to index
      %73 = arith.index_cast %71 : i32 to index
      %74 = memref.load %arg2[%72, %73] : memref<2x16xi32, #tpu.memory_space<smem>>
      %75 = arith.index_cast %74 : i32 to index
      %c0_21 = arith.constant 0 : index
      %76 = vector.load %arg4[%75, %c0_21] : memref<16x32xf32, #tpu.memory_space<vmem>>, vector<1x32xf32>
      %77 = arith.addi %3, %c3_i32 : i32
      %c0_22 = arith.constant 0 : index
      %78 = arith.index_cast %77 : i32 to index
      %c0_23 = arith.constant 0 : index
      %79 = vector.load %arg5[%c0_22, %78, %c0_23] : memref<1x16x32xf32, #tpu.memory_space<vmem>>, vector<1x1x32xf32>
      %80 = vector.shape_cast %79 : vector<1x1x32xf32> to vector<1x32xf32>
      %81 = vector.shape_cast %76 : vector<1x32xf32> to vector<1x1x32xf32>
      tpu.vector_store %arg5[%c0_22, %78, %c0_23], %81 {strides = array<i32>} : memref<1x16x32xf32, #tpu.memory_space<vmem>>, vector<1x1x32xf32>,
      %c4_i32 = arith.constant 4 : i32
      %82 = arith.addi %0, %3 : i32
      %83 = arith.addi %82, %c4_i32 : i32
      %84 = arith.index_cast %arg0 : i32 to index
      %85 = arith.index_cast %83 : i32 to index
      %86 = memref.load %arg2[%84, %85] : memref<2x16xi32, #tpu.memory_space<smem>>
      %87 = arith.index_cast %86 : i32 to index
      %c0_24 = arith.constant 0 : index
      %88 = vector.load %arg4[%87, %c0_24] : memref<16x32xf32, #tpu.memory_space<vmem>>, vector<1x32xf32>
      %89 = arith.addi %3, %c4_i32 : i32
      %c0_25 = arith.constant 0 : index
      %90 = arith.index_cast %89 : i32 to index
      %c0_26 = arith.constant 0 : index
      %91 = vector.load %arg5[%c0_25, %90, %c0_26] : memref<1x16x32xf32, #tpu.memory_space<vmem>>, vector<1x1x32xf32>
      %92 = vector.shape_cast %91 : vector<1x1x32xf32> to vector<1x32xf32>
      %93 = vector.shape_cast %88 : vector<1x32xf32> to vector<1x1x32xf32>
      tpu.vector_store %arg5[%c0_25, %90, %c0_26], %93 {strides = array<i32>} : memref<1x16x32xf32, #tpu.memory_space<vmem>>, vector<1x1x32xf32>,
      %c5_i32 = arith.constant 5 : i32
      %94 = arith.addi %0, %3 : i32
      %95 = arith.addi %94, %c5_i32 : i32
      %96 = arith.index_cast %arg0 : i32 to index
      %97 = arith.index_cast %95 : i32 to index
      %98 = memref.load %arg2[%96, %97] : memref<2x16xi32, #tpu.memory_space<smem>>
      %99 = arith.index_cast %98 : i32 to index
      %c0_27 = arith.constant 0 : index
      %100 = vector.load %arg4[%99, %c0_27] : memref<16x32xf32, #tpu.memory_space<vmem>>, vector<1x32xf32>
      %101 = arith.addi %3, %c5_i32 : i32
      %c0_28 = arith.constant 0 : index
      %102 = arith.index_cast %101 : i32 to index
      %c0_29 = arith.constant 0 : index
      %103 = vector.load %arg5[%c0_28, %102, %c0_29] : memref<1x16x32xf32, #tpu.memory_space<vmem>>, vector<1x1x32xf32>
      %104 = vector.shape_cast %103 : vector<1x1x32xf32> to vector<1x32xf32>
      %105 = vector.shape_cast %100 : vector<1x32xf32> to vector<1x1x32xf32>
      tpu.vector_store %arg5[%c0_28, %102, %c0_29], %105 {strides = array<i32>} : memref<1x16x32xf32, #tpu.memory_space<vmem>>, vector<1x1x32xf32>,
      %c6_i32 = arith.constant 6 : i32
      %106 = arith.addi %0, %3 : i32
      %107 = arith.addi %106, %c6_i32 : i32
      %108 = arith.index_cast %arg0 : i32 to index
      %109 = arith.index_cast %107 : i32 to index
      %110 = memref.load %arg2[%108, %109] : memref<2x16xi32, #tpu.memory_space<smem>>
      %111 = arith.index_cast %110 : i32 to index
      %c0_30 = arith.constant 0 : index
      %112 = vector.load %arg4[%111, %c0_30] : memref<16x32xf32, #tpu.memory_space<vmem>>, vector<1x32xf32>
      %113 = arith.addi %3, %c6_i32 : i32
      %c0_31 = arith.constant 0 : index
      %114 = arith.index_cast %113 : i32 to index
      %c0_32 = arith.constant 0 : index
      %115 = vector.load %arg5[%c0_31, %114, %c0_32] : memref<1x16x32xf32, #tpu.memory_space<vmem>>, vector<1x1x32xf32>
      %116 = vector.shape_cast %115 : vector<1x1x32xf32> to vector<1x32xf32>
      %117 = vector.shape_cast %112 : vector<1x32xf32> to vector<1x1x32xf32>
      tpu.vector_store %arg5[%c0_31, %114, %c0_32], %117 {strides = array<i32>} : memref<1x16x32xf32, #tpu.memory_space<vmem>>, vector<1x1x32xf32>,
      %c7_i32 = arith.constant 7 : i32
      %118 = arith.addi %0, %3 : i32
      %119 = arith.addi %118, %c7_i32 : i32
      %120 = arith.index_cast %arg0 : i32 to index
      %121 = arith.index_cast %119 : i32 to index
      %122 = memref.load %arg2[%120, %121] : memref<2x16xi32, #tpu.memory_space<smem>>
      %123 = arith.index_cast %122 : i32 to index
      %c0_33 = arith.constant 0 : index
      %124 = vector.load %arg4[%123, %c0_33] : memref<16x32xf32, #tpu.memory_space<vmem>>, vector<1x32xf32>
      %125 = arith.addi %3, %c7_i32 : i32
      %c0_34 = arith.constant 0 : index
      %126 = arith.index_cast %125 : i32 to index
      %c0_35 = arith.constant 0 : index
      %127 = vector.load %arg5[%c0_34, %126, %c0_35] : memref<1x16x32xf32, #tpu.memory_space<vmem>>, vector<1x1x32xf32>
      %128 = vector.shape_cast %127 : vector<1x1x32xf32> to vector<1x32xf32>
      %129 = vector.shape_cast %124 : vector<1x32xf32> to vector<1x1x32xf32>
      tpu.vector_store %arg5[%c0_34, %126, %c0_35], %129 {strides = array<i32>} : memref<1x16x32xf32, #tpu.memory_space<vmem>>, vector<1x1x32xf32>,
      %c8_i32_36 = arith.constant 8 : i32
    } else {
    }
    %c1_i32_3 = arith.constant 1 : i32
    %c8_i32_4 = arith.constant 8 : i32
    %18 = arith.muli %c1_i32_3, %c8_i32_4 : i32
    %19 = tpu.assume_multiple %18, 8 : i32
    %20 = arith.addi %1, %c1_i32_3 : i32
    %21 = arith.index_cast %arg0 : i32 to index
    %22 = arith.index_cast %20 : i32 to index
    %23 = memref.load %arg3[%21, %22] : memref<2x2xi32, #tpu.memory_space<smem>>
    %24 = arith.addi %0, %19 : i32
    %25 = arith.index_cast %arg0 : i32 to index
    %26 = arith.index_cast %24 : i32 to index
    %27 = memref.load %arg2[%25, %26] : memref<2x16xi32, #tpu.memory_space<smem>>
    %c1_i32_5 = arith.constant 1 : i32
    %28 = arith.cmpi eq, %23, %c1_i32_5 : i32
    %29 = arith.extui %28 : i1 to i32
    %c0_i32_6 = arith.constant 0 : i32
    %30 = arith.cmpi ne, %29, %c0_i32_6 : i32
    scf.if %30 {
      %34 = arith.index_cast %27 : i32 to index
      %c0 = arith.constant 0 : index
      %35 = vector.load %arg4[%34, %c0] : memref<16x32xf32, #tpu.memory_space<vmem>>, vector<8x32xf32>
      %c0_10 = arith.constant 0 : index
      %36 = arith.index_cast %19 : i32 to index
      %c0_11 = arith.constant 0 : index
      %37 = vector.load %arg5[%c0_10, %36, %c0_11] : memref<1x16x32xf32, #tpu.memory_space<vmem>>, vector<1x8x32xf32>
      %38 = vector.shape_cast %37 : vector<1x8x32xf32> to vector<8x32xf32>
      %39 = vector.shape_cast %35 : vector<8x32xf32> to vector<1x8x32xf32>
      tpu.vector_store %arg5[%c0_10, %36, %c0_11], %39 {strides = array<i32>} : memref<1x16x32xf32, #tpu.memory_space<vmem>>, vector<1x8x32xf32>,
    } else {
    }
    %c1_i32_7 = arith.constant 1 : i32
    %31 = arith.cmpi ne, %23, %c1_i32_7 : i32
    %32 = arith.extui %31 : i1 to i32
    %c0_i32_8 = arith.constant 0 : i32
    %33 = arith.cmpi ne, %32, %c0_i32_8 : i32
    scf.if %33 {
      %c0_i32_10 = arith.constant 0 : i32
      %34 = arith.addi %0, %19 : i32
      %35 = arith.addi %34, %c0_i32_10 : i32
      %36 = arith.index_cast %arg0 : i32 to index
      %37 = arith.index_cast %35 : i32 to index
      %38 = memref.load %arg2[%36, %37] : memref<2x16xi32, #tpu.memory_space<smem>>
      %39 = arith.index_cast %38 : i32 to index
      %c0 = arith.constant 0 : index
      %40 = vector.load %arg4[%39, %c0] : memref<16x32xf32, #tpu.memory_space<vmem>>, vector<1x32xf32>
      %41 = arith.addi %19, %c0_i32_10 : i32
      %c0_11 = arith.constant 0 : index
      %42 = arith.index_cast %41 : i32 to index
      %c0_12 = arith.constant 0 : index
      %43 = vector.load %arg5[%c0_11, %42, %c0_12] : memref<1x16x32xf32, #tpu.memory_space<vmem>>, vector<1x1x32xf32>
      %44 = vector.shape_cast %43 : vector<1x1x32xf32> to vector<1x32xf32>
      %45 = vector.shape_cast %40 : vector<1x32xf32> to vector<1x1x32xf32>
      tpu.vector_store %arg5[%c0_11, %42, %c0_12], %45 {strides = array<i32>} : memref<1x16x32xf32, #tpu.memory_space<vmem>>, vector<1x1x32xf32>,
      %c1_i32_13 = arith.constant 1 : i32
      %46 = arith.addi %0, %19 : i32
      %47 = arith.addi %46, %c1_i32_13 : i32
      %48 = arith.index_cast %arg0 : i32 to index
      %49 = arith.index_cast %47 : i32 to index
      %50 = memref.load %arg2[%48, %49] : memref<2x16xi32, #tpu.memory_space<smem>>
      %51 = arith.index_cast %50 : i32 to index
      %c0_14 = arith.constant 0 : index
      %52 = vector.load %arg4[%51, %c0_14] : memref<16x32xf32, #tpu.memory_space<vmem>>, vector<1x32xf32>
      %53 = arith.addi %19, %c1_i32_13 : i32
      %c0_15 = arith.constant 0 : index
      %54 = arith.index_cast %53 : i32 to index
      %c0_16 = arith.constant 0 : index
      %55 = vector.load %arg5[%c0_15, %54, %c0_16] : memref<1x16x32xf32, #tpu.memory_space<vmem>>, vector<1x1x32xf32>
      %56 = vector.shape_cast %55 : vector<1x1x32xf32> to vector<1x32xf32>
      %57 = vector.shape_cast %52 : vector<1x32xf32> to vector<1x1x32xf32>
      tpu.vector_store %arg5[%c0_15, %54, %c0_16], %57 {strides = array<i32>} : memref<1x16x32xf32, #tpu.memory_space<vmem>>, vector<1x1x32xf32>,
      %c2_i32_17 = arith.constant 2 : i32
      %58 = arith.addi %0, %19 : i32
      %59 = arith.addi %58, %c2_i32_17 : i32
      %60 = arith.index_cast %arg0 : i32 to index
      %61 = arith.index_cast %59 : i32 to index
      %62 = memref.load %arg2[%60, %61] : memref<2x16xi32, #tpu.memory_space<smem>>
      %63 = arith.index_cast %62 : i32 to index
      %c0_18 = arith.constant 0 : index
      %64 = vector.load %arg4[%63, %c0_18] : memref<16x32xf32, #tpu.memory_space<vmem>>, vector<1x32xf32>
      %65 = arith.addi %19, %c2_i32_17 : i32
      %c0_19 = arith.constant 0 : index
      %66 = arith.index_cast %65 : i32 to index
      %c0_20 = arith.constant 0 : index
      %67 = vector.load %arg5[%c0_19, %66, %c0_20] : memref<1x16x32xf32, #tpu.memory_space<vmem>>, vector<1x1x32xf32>
      %68 = vector.shape_cast %67 : vector<1x1x32xf32> to vector<1x32xf32>
      %69 = vector.shape_cast %64 : vector<1x32xf32> to vector<1x1x32xf32>
      tpu.vector_store %arg5[%c0_19, %66, %c0_20], %69 {strides = array<i32>} : memref<1x16x32xf32, #tpu.memory_space<vmem>>, vector<1x1x32xf32>,
      %c3_i32 = arith.constant 3 : i32
      %70 = arith.addi %0, %19 : i32
      %71 = arith.addi %70, %c3_i32 : i32
      %72 = arith.index_cast %arg0 : i32 to index
      %73 = arith.index_cast %71 : i32 to index
      %74 = memref.load %arg2[%72, %73] : memref<2x16xi32, #tpu.memory_space<smem>>
      %75 = arith.index_cast %74 : i32 to index
      %c0_21 = arith.constant 0 : index
      %76 = vector.load %arg4[%75, %c0_21] : memref<16x32xf32, #tpu.memory_space<vmem>>, vector<1x32xf32>
      %77 = arith.addi %19, %c3_i32 : i32
      %c0_22 = arith.constant 0 : index
      %78 = arith.index_cast %77 : i32 to index
      %c0_23 = arith.constant 0 : index
      %79 = vector.load %arg5[%c0_22, %78, %c0_23] : memref<1x16x32xf32, #tpu.memory_space<vmem>>, vector<1x1x32xf32>
      %80 = vector.shape_cast %79 : vector<1x1x32xf32> to vector<1x32xf32>
      %81 = vector.shape_cast %76 : vector<1x32xf32> to vector<1x1x32xf32>
      tpu.vector_store %arg5[%c0_22, %78, %c0_23], %81 {strides = array<i32>} : memref<1x16x32xf32, #tpu.memory_space<vmem>>, vector<1x1x32xf32>,
      %c4_i32 = arith.constant 4 : i32
      %82 = arith.addi %0, %19 : i32
      %83 = arith.addi %82, %c4_i32 : i32
      %84 = arith.index_cast %arg0 : i32 to index
      %85 = arith.index_cast %83 : i32 to index
      %86 = memref.load %arg2[%84, %85] : memref<2x16xi32, #tpu.memory_space<smem>>
      %87 = arith.index_cast %86 : i32 to index
      %c0_24 = arith.constant 0 : index
      %88 = vector.load %arg4[%87, %c0_24] : memref<16x32xf32, #tpu.memory_space<vmem>>, vector<1x32xf32>
      %89 = arith.addi %19, %c4_i32 : i32
      %c0_25 = arith.constant 0 : index
      %90 = arith.index_cast %89 : i32 to index
      %c0_26 = arith.constant 0 : index
      %91 = vector.load %arg5[%c0_25, %90, %c0_26] : memref<1x16x32xf32, #tpu.memory_space<vmem>>, vector<1x1x32xf32>
      %92 = vector.shape_cast %91 : vector<1x1x32xf32> to vector<1x32xf32>
      %93 = vector.shape_cast %88 : vector<1x32xf32> to vector<1x1x32xf32>
      tpu.vector_store %arg5[%c0_25, %90, %c0_26], %93 {strides = array<i32>} : memref<1x16x32xf32, #tpu.memory_space<vmem>>, vector<1x1x32xf32>,
      %c5_i32 = arith.constant 5 : i32
      %94 = arith.addi %0, %19 : i32
      %95 = arith.addi %94, %c5_i32 : i32
      %96 = arith.index_cast %arg0 : i32 to index
      %97 = arith.index_cast %95 : i32 to index
      %98 = memref.load %arg2[%96, %97] : memref<2x16xi32, #tpu.memory_space<smem>>
      %99 = arith.index_cast %98 : i32 to index
      %c0_27 = arith.constant 0 : index
      %100 = vector.load %arg4[%99, %c0_27] : memref<16x32xf32, #tpu.memory_space<vmem>>, vector<1x32xf32>
      %101 = arith.addi %19, %c5_i32 : i32
      %c0_28 = arith.constant 0 : index
      %102 = arith.index_cast %101 : i32 to index
      %c0_29 = arith.constant 0 : index
      %103 = vector.load %arg5[%c0_28, %102, %c0_29] : memref<1x16x32xf32, #tpu.memory_space<vmem>>, vector<1x1x32xf32>
      %104 = vector.shape_cast %103 : vector<1x1x32xf32> to vector<1x32xf32>
      %105 = vector.shape_cast %100 : vector<1x32xf32> to vector<1x1x32xf32>
      tpu.vector_store %arg5[%c0_28, %102, %c0_29], %105 {strides = array<i32>} : memref<1x16x32xf32, #tpu.memory_space<vmem>>, vector<1x1x32xf32>,
      %c6_i32 = arith.constant 6 : i32
      %106 = arith.addi %0, %19 : i32
      %107 = arith.addi %106, %c6_i32 : i32
      %108 = arith.index_cast %arg0 : i32 to index
      %109 = arith.index_cast %107 : i32 to index
      %110 = memref.load %arg2[%108, %109] : memref<2x16xi32, #tpu.memory_space<smem>>
      %111 = arith.index_cast %110 : i32 to index
      %c0_30 = arith.constant 0 : index
      %112 = vector.load %arg4[%111, %c0_30] : memref<16x32xf32, #tpu.memory_space<vmem>>, vector<1x32xf32>
      %113 = arith.addi %19, %c6_i32 : i32
      %c0_31 = arith.constant 0 : index
      %114 = arith.index_cast %113 : i32 to index
      %c0_32 = arith.constant 0 : index
      %115 = vector.load %arg5[%c0_31, %114, %c0_32] : memref<1x16x32xf32, #tpu.memory_space<vmem>>, vector<1x1x32xf32>
      %116 = vector.shape_cast %115 : vector<1x1x32xf32> to vector<1x32xf32>
      %117 = vector.shape_cast %112 : vector<1x32xf32> to vector<1x1x32xf32>
      tpu.vector_store %arg5[%c0_31, %114, %c0_32], %117 {strides = array<i32>} : memref<1x16x32xf32, #tpu.memory_space<vmem>>, vector<1x1x32xf32>,
      %c7_i32 = arith.constant 7 : i32
      %118 = arith.addi %0, %19 : i32
      %119 = arith.addi %118, %c7_i32 : i32
      %120 = arith.index_cast %arg0 : i32 to index
      %121 = arith.index_cast %119 : i32 to index
      %122 = memref.load %arg2[%120, %121] : memref<2x16xi32, #tpu.memory_space<smem>>
      %123 = arith.index_cast %122 : i32 to index
      %c0_33 = arith.constant 0 : index
      %124 = vector.load %arg4[%123, %c0_33] : memref<16x32xf32, #tpu.memory_space<vmem>>, vector<1x32xf32>
      %125 = arith.addi %19, %c7_i32 : i32
      %c0_34 = arith.constant 0 : index
      %126 = arith.index_cast %125 : i32 to index
      %c0_35 = arith.constant 0 : index
      %127 = vector.load %arg5[%c0_34, %126, %c0_35] : memref<1x16x32xf32, #tpu.memory_space<vmem>>, vector<1x1x32xf32>
      %128 = vector.shape_cast %127 : vector<1x1x32xf32> to vector<1x32xf32>
      %129 = vector.shape_cast %124 : vector<1x32xf32> to vector<1x1x32xf32>
      tpu.vector_store %arg5[%c0_34, %126, %c0_35], %129 {strides = array<i32>} : memref<1x16x32xf32, #tpu.memory_space<vmem>>, vector<1x1x32xf32>,
      %c8_i32_36 = arith.constant 8 : i32
    } else {
    }
    %c2_i32_9 = arith.constant 2 : i32
    return
  }
  func.func @transform_0(%arg0: i32, %arg1: i32, %arg2: memref<2x16xi32, #tpu.memory_space<smem>>, %arg3: memref<2x2xi32, #tpu.memory_space<smem>>) -> (i32, i32) {
    %c0_i32 = arith.constant 0 : i32
    %c0_i32_0 = arith.constant 0 : i32
    %c0_i32_1 = arith.constant 0 : i32
    return %c0_i32, %c0_i32_0 : i32, i32
  }
  func.func @transform_1(%arg0: i32, %arg1: i32, %arg2: memref<2x16xi32, #tpu.memory_space<smem>>, %arg3: memref<2x2xi32, #tpu.memory_space<smem>>) -> (i32, i32, i32) {
    %c0_i32 = arith.constant 0 : i32
    %c0_i32_0 = arith.constant 0 : i32
    return %arg0, %arg1, %c0_i32 : i32, i32, i32
  }
}

</mosaic_0001>

<llo_original>
// kernel: tpu_custom_call.1
$region0: #{tpu_custom_call.1}
  #allocation0 [shape = 'u32[]', space=smem, size = 0x4, offset = 0x4, fixed_abs, tag = 'smem constant byte address 0x4 - core index']
  #allocation1 [shape = 'u32[144,128]{1,0:T(1,128)}', space=vmem, size = 0x12000, scoped, tag = 'internal scratch']
  #allocation2 [shape = 's32[1]{0}', space=sflag, size = 0x4, scoped, tag = 'scoped memory for tpu_custom_call.1']
  #allocation3 [shape = 'u8[1024]{0}', space=smem, size = 0x400, scoped, tag = 'prefetched SMEM operand 0']
  #allocation4 [shape = 'u8[1024]{0}', space=smem, size = 0x400, scoped, tag = 'prefetched SMEM operand 1']
  %s0 = inlined_call_operand.vmem [shape: s32[2,16], index: 0, kind: input, shape index: {}]
  %s1 = inlined_call_operand.vmem [shape: s32[2,2], index: 1, kind: input, shape index: {}]
  %s2 = inlined_call_operand.vmem [shape: f32[64,32], index: 2, kind: input, shape index: {}]
  %s3 = inlined_call_operand.hbm [shape: f32[2,16,32], index: 3, kind: output, shape index: {}]
  %s4 = sld [smem:[#allocation0]]
  $region53: #{tpu_custom_call.1} parent=0
    _
  %s6 = ssub.s32 1, %s4
  %s7 = scalar_select 0, %s6, %s4
  %s8 = sshll.u32 %s0, 4
  %s9 = int_to_ptr.vmem [resolvable:$true] %s8
  %11 = dma.vmem_to_smem %s9, 32, [#allocation3], [#allocation2]
  %s12 = sshll.u32 %s1, 4
  %s13 = int_to_ptr.vmem [resolvable:$true] %s12
  %15 = dma.vmem_to_smem %s13, 32, [#allocation4], [#allocation2]
  %16 = dma.done [#allocation2], 64
  %17 = sfence
  $region1: #{tpu_custom_call.1} parent=0
    #allocation5 [shape = 'u8[16384]{0}', space=vmem, size = 0x4000, scoped, tag = 'output window, operand 0']
    #allocation6 [shape = 's32[2]{0}', space=sflag, size = 0x8, scoped, tag = 'scoped memory for tpu_custom_call.1']
    %18 = vsyncpa [#allocation6], 0
    %s19 = scalar_lea.sflag [#allocation6], 1
    %20 = vsyncpa %s19, 0
    loop: start=0, step=1, limit=4
    $region2: #{tpu_custom_call.1} parent=1 // loop_pre_header
      _
    $region3: #{tpu_custom_call.1} parent=1 // loop_header
      %s22 = sphi 0, %s26
      %p23 = scmp.ge.s32.totalorder %s22, 4
      %s29 = sphi 0, %s41
      %s30 = sphi 0, %s37
      %s31 = sphi 0, %s29
      %s32 = sphi 0, %s30
      %s33 = sphi 0, %s31
      %s34 = sphi 0, %s32
      %s42 = sphi 0, %s42
      %s44 = sphi 0, %s42
      %s45 = sphi 0, %s44
      %s59 = sphi 0, %s45
      %s67 = sphi 0, %s69
      %s70 = sphi 0, %s67
      %s71 = sphi 0, %s70
      %s87 = sphi 0, %s71
    $region4: #{tpu_custom_call.1} parent=1 // loop_header_branch
      %25 = sbr.rel (%p23) target = $region8
    $region5: #{tpu_custom_call.1} parent=1 // loop_body
      %s27 = ssub.s32 %s22, 1
      %s28 = ssub.s32 %s22, 2
      %s35 = sadd.s32 1, %s30
      %p36 = scmp.ge.s32.totalorder %s35, 1
      %s37 = scalar_select %p36, 0, %s35
      %s38 = sadd.s32 1, %s29
      %s39 = scalar_select %p36, %s38, %s29
      %p40 = scmp.ge.s32.totalorder %s39, 2
      %s41 = scalar_select %p40, 0, %s39
      %s43 = sadd.s32 %s42, 1
      %p46 = scmp.eq.s32.totalorder %s22, 1
      %p47 = scmp.ne.s32.totalorder %s42, %s44
      %p48 = scmp.eq.s32.totalorder %s22, 0
      %p49 = por %p47, %p48
      %p50 = scmp.ne.s32.totalorder %s42, %s44
      %p51 = scmp.eq.s32.totalorder %s27, 1
      %p52 = por %p50, %p51
      %p53 = scmp.ne.s32.totalorder %s44, %s45
      %p54 = scmp.eq.s32.totalorder %s27, 0
      %p55 = por %p53, %p54
      %p56 = scmp.ne.s32.totalorder %s44, %s45
      %p57 = scmp.eq.s32.totalorder %s28, 1
      %p58 = por %p56, %p57
      %p60 = scmp.ne.s32.totalorder %s45, %s59
      %p61 = scmp.eq.s32.totalorder %s28, 0
      %p62 = por %p60, %p61
      %s63 = ssub.s32 %s29, %s41
      %s64 = ssub.s32 %s30, %s37
      %s65 = sor.u32 %s63, %s64
      %p66 = scmp.eq.s32.totalorder %s65, 0
      %s68 = sadd.s32 %s67, 1
      %s69 = scalar_select %p66, %s67, %s68
      %p72 = pneg %p66
      %p73 = scmp.eq.s32.totalorder %s22, 1
      %p74 = por %p72, %p73
      %p75 = scmp.ne.s32.totalorder %s67, %s70
      %p76 = scmp.eq.s32.totalorder %s22, 0
      %p77 = por %p75, %p76
      %p78 = scmp.ne.s32.totalorder %s67, %s70
      %p79 = scmp.eq.s32.totalorder %s27, 1
      %p80 = por %p78, %p79
      %p81 = scmp.ne.s32.totalorder %s70, %s71
      %p82 = scmp.eq.s32.totalorder %s27, 0
      %p83 = por %p81, %p82
      %p84 = scmp.ne.s32.totalorder %s70, %s71
      %p85 = scmp.eq.s32.totalorder %s28, 1
      %p86 = por %p84, %p85
      %p88 = scmp.ne.s32.totalorder %s71, %s87
      %p89 = scmp.eq.s32.totalorder %s28, 0
      %p90 = por %p88, %p89
      %p91 = scmp.le.s32.totalorder 1, %s22
      %p92 = scmp.lt.s32.totalorder %s22, 3
      %p93 = pnand %p91, %p92
      %p94 = pneg %p93
      // Predicated region
      $region9: #{tpu_custom_call.1} parent=5 // pred_check
        _
      $region10: #{tpu_custom_call.1} parent=5 // pred_check_branch
        %96 = sbr.rel (%p93) target = $region12
      $region11: #{tpu_custom_call.1} parent=5 // pred_region
        %s97 = ssub.s32 %s22, 1
        // Predicated region
        $region13: #{tpu_custom_call.1} parent=11 // pred_check
          %p98 = pneg %p55
        $region14: #{tpu_custom_call.1} parent=11 // pred_check_branch
          %100 = sbr.rel (%p98) target = $region16
        $region15: #{tpu_custom_call.1} parent=11 // pred_region
          _
        $region16: #{tpu_custom_call.1} parent=11 // pred_fallthru
          _
      $region12: #{tpu_custom_call.1} parent=5 // pred_fallthru
        _
      %p101 = scmp.lt.s32.totalorder %s22, 2
      // Predicated region
      $region17: #{tpu_custom_call.1} parent=5 // pred_check
        %p102 = pneg %p101
      $region18: #{tpu_custom_call.1} parent=5 // pred_check_branch
        %104 = sbr.rel (%p102) target = $region20
      $region19: #{tpu_custom_call.1} parent=5 // pred_region
        _
      $region20: #{tpu_custom_call.1} parent=5 // pred_fallthru
        _
      %p105 = scmp.le.s32.totalorder 1, %s22
      %p106 = scmp.lt.s32.totalorder %s22, 3
      %p107 = pnand %p105, %p106
      %p108 = pneg %p107
      // Predicated region
      $region21: #{tpu_custom_call.1} parent=5 // pred_check
        _
      $region22: #{tpu_custom_call.1} parent=5 // pred_check_branch
        %110 = sbr.rel (%p107) target = $region24
      $region23: #{tpu_custom_call.1} parent=5 // pred_region
        %s111 = ssub.s32 %s22, 1
        %p112 = pneg %p55
        %p113 = pneg %p52
        %p114 = pneg %p83
        %p115 = pneg %p80
        %s116 = sand.u32 %s70, 1
        %s117 = scalar_lea.sflag [#allocation6], %s116
        %s118 = sand.u32 %s70, 1
        %s119 = smul.addr %s118, 16
        %s120 = scalar_lea.vmem [#allocation5], %s119
        %s121 = smul.u32 2, %s32
        %s122 = smul.u32 %s32, 16
        %s123 = smul.u32 %s32, 2
        %s124 = sshra.s32 %s123, 7
        %s125 = sand.u32 %s123, 127
        %s126 = sadd.s32 %s124, %s31
        %s127 = smul.u32 %s126, 128
        %s128 = sshra.s32 %s123, 7
        %s129 = sand.u32 %s123, 127
        %s130 = sadd.s32 %s127, %s129
        %s131 = sld [smem:[#allocation4 + %s130]]
        %s132 = sadd.s32 %s122, 0
        %s133 = sshra.s32 %s132, 7
        %s134 = sand.u32 %s132, 127
        %s135 = sadd.s32 %s133, %s31
        %s136 = smul.u32 %s135, 128
        %s137 = sshra.s32 %s132, 7
        %s138 = sand.u32 %s132, 127
        %s139 = sadd.s32 %s136, %s138
        %s140 = sld [smem:[#allocation3 + %s139]]
        %p141 = scmp.eq.s32.totalorder %s131, 1
        // Predicated region
        $region25: #{tpu_custom_call.1} parent=23 // pred_check
          %p142 = pneg %p141
        $region26: #{tpu_custom_call.1} parent=23 // pred_check_branch
          %144 = sbr.rel (%p142) target = $region28
        $region27: #{tpu_custom_call.1} parent=23 // pred_region
          %s145 = scalar_lea.vmem %s2, %s140
          %v146 = vld [vmem:[%s145] sm:$0xff]
          %vm147 = vcmask 261120
          %148 = vst.msk [vmem:[%s120] sm:$0xff] %vm147, %v146
        $region28: #{tpu_custom_call.1} parent=23 // pred_fallthru
          _
        %p149 = scmp.ne.s32.totalorder %s131, 1
        // Predicated region
        $region29: #{tpu_custom_call.1} parent=23 // pred_check
          %p150 = pneg %p149
        $region30: #{tpu_custom_call.1} parent=23 // pred_check_branch
          %152 = sbr.rel (%p150) target = $region32
        $region31: #{tpu_custom_call.1} parent=23 // pred_region
          %s153 = sld [smem:[#allocation3 + %s139]]
          %s154 = scalar_lea.vmem %s2, %s153
          %v155 = vld [vmem:[%s154] sm:$0x1]
          %vm156 = vcmask 253952
          %157 = vst.msk [vmem:[%s120] sm:$0x1] %vm156, %v155
          %s158 = sadd.s32 %s132, 1
          %s159 = sshra.s32 %s158, 7
          %s160 = sand.u32 %s158, 127
          %s161 = sadd.s32 %s159, %s31
          %s162 = smul.u32 %s161, 128
          %s163 = sshra.s32 %s158, 7
          %s164 = sand.u32 %s158, 127
          %s165 = sadd.s32 %s162, %s164
          %s166 = sld [smem:[#allocation3 + %s165]]
          %s167 = scalar_lea.vmem %s2, %s166
          %v168 = vld [vmem:[%s167] sm:$0x1]
          %s169 = sadd.s32 0, 1
          %s170 = scalar_lea.vmem %s120, %s169 [#allocation5]
          %171 = vst.msk [vmem:[%s170] sm:$0x1] %vm156, %v168
          %s172 = sadd.s32 %s132, 2
          %s173 = sshra.s32 %s172, 7
          %s174 = sand.u32 %s172, 127
          %s175 = sadd.s32 %s173, %s31
          %s176 = smul.u32 %s175, 128
          %s177 = sshra.s32 %s172, 7
          %s178 = sand.u32 %s172, 127
          %s179 = sadd.s32 %s176, %s178
          %s180 = sld [smem:[#allocation3 + %s179]]
          %s181 = scalar_lea.vmem %s2, %s180
          %v182 = vld [vmem:[%s181] sm:$0x1]
          %s183 = sadd.s32 0, 2
          %s184 = scalar_lea.vmem %s120, %s183 [#allocation5]
          %185 = vst.msk [vmem:[%s184] sm:$0x1] %vm156, %v182
          %s186 = sadd.s32 %s132, 3
          %s187 = sshra.s32 %s186, 7
          %s188 = sand.u32 %s186, 127
          %s189 = sadd.s32 %s187, %s31
          %s190 = smul.u32 %s189, 128
          %s191 = sshra.s32 %s186, 7
          %s192 = sand.u32 %s186, 127
          %s193 = sadd.s32 %s190, %s192
          %s194 = sld [smem:[#allocation3 + %s193]]
          %s195 = scalar_lea.vmem %s2, %s194
          %v196 = vld [vmem:[%s195] sm:$0x1]
          %s197 = sadd.s32 0, 3
          %s198 = scalar_lea.vmem %s120, %s197 [#allocation5]
          %199 = vst.msk [vmem:[%s198] sm:$0x1] %vm156, %v196
          %s200 = sadd.s32 %s132, 4
          %s201 = sshra.s32 %s200, 7
          %s202 = sand.u32 %s200, 127
          %s203 = sadd.s32 %s201, %s31
          %s204 = smul.u32 %s203, 128
          %s205 = sshra.s32 %s200, 7
          %s206 = sand.u32 %s200, 127
          %s207 = sadd.s32 %s204, %s206
          %s208 = sld [smem:[#allocation3 + %s207]]
          %s209 = scalar_lea.vmem %s2, %s208
          %v210 = vld [vmem:[%s209] sm:$0x1]
          %s211 = sadd.s32 0, 4
          %s212 = scalar_lea.vmem %s120, %s211 [#allocation5]
          %213 = vst.msk [vmem:[%s212] sm:$0x1] %vm156, %v210
          %s214 = sadd.s32 %s132, 5
          %s215 = sshra.s32 %s214, 7
          %s216 = sand.u32 %s214, 127
          %s217 = sadd.s32 %s215, %s31
          %s218 = smul.u32 %s217, 128
          %s219 = sshra.s32 %s214, 7
          %s220 = sand.u32 %s214, 127
          %s221 = sadd.s32 %s218, %s220
          %s222 = sld [smem:[#allocation3 + %s221]]
          %s223 = scalar_lea.vmem %s2, %s222
          %v224 = vld [vmem:[%s223] sm:$0x1]
          %s225 = sadd.s32 0, 5
          %s226 = scalar_lea.vmem %s120, %s225 [#allocation5]
          %227 = vst.msk [vmem:[%s226] sm:$0x1] %vm156, %v224
          %s228 = sadd.s32 %s132, 6
          %s229 = sshra.s32 %s228, 7
          %s230 = sand.u32 %s228, 127
          %s231 = sadd.s32 %s229, %s31
          %s232 = smul.u32 %s231, 128
          %s233 = sshra.s32 %s228, 7
          %s234 = sand.u32 %s228, 127
          %s235 = sadd.s32 %s232, %s234
          %s236 = sld [smem:[#allocation3 + %s235]]
          %s237 = scalar_lea.vmem %s2, %s236
          %v238 = vld [vmem:[%s237] sm:$0x1]
          %s239 = sadd.s32 0, 6
          %s240 = scalar_lea.vmem %s120, %s239 [#allocation5]
          %241 = vst.msk [vmem:[%s240] sm:$0x1] %vm156, %v238
          %s242 = sadd.s32 %s132, 7
          %s243 = sshra.s32 %s242, 7
          %s244 = sand.u32 %s242, 127
          %s245 = sadd.s32 %s243, %s31
          %s246 = smul.u32 %s245, 128
          %s247 = sshra.s32 %s242, 7
          %s248 = sand.u32 %s242, 127
          %s249 = sadd.s32 %s246, %s248
          %s250 = sld [smem:[#allocation3 + %s249]]
          %s251 = scalar_lea.vmem %s2, %s250
          %v252 = vld [vmem:[%s251] sm:$0x1]
          %s253 = sadd.s32 0, 7
          %s254 = scalar_lea.vmem %s120, %s253 [#allocation5]
          %255 = vst.msk [vmem:[%s254] sm:$0x1] %vm156, %v252
        $region32: #{tpu_custom_call.1} parent=23 // pred_fallthru
          _
        %s256 = sadd.s32 %s123, 1
        %s257 = sshra.s32 %s256, 7
        %s258 = sand.u32 %s256, 127
        %s259 = sadd.s32 %s257, %s31
        %s260 = smul.u32 %s259, 128
        %s261 = sshra.s32 %s256, 7
        %s262 = sand.u32 %s256, 127
        %s263 = sadd.s32 %s260, %s262
        %s264 = sld [smem:[#allocation4 + %s263]]
        %s265 = sadd.s32 %s122, 8
        %s266 = sshra.s32 %s265, 7
        %s267 = sand.u32 %s265, 127
        %s268 = sadd.s32 %s266, %s31
        %s269 = smul.u32 %s268, 128
        %s270 = sshra.s32 %s265, 7
        %s271 = sand.u32 %s265, 127
        %s272 = sadd.s32 %s269, %s271
        %s273 = sld [smem:[#allocation3 + %s272]]
        %p274 = scmp.eq.s32.totalorder %s264, 1
        // Predicated region
        $region33: #{tpu_custom_call.1} parent=23 // pred_check
          %p275 = pneg %p274
        $region34: #{tpu_custom_call.1} parent=23 // pred_check_branch
          %277 = sbr.rel (%p275) target = $region36
        $region35: #{tpu_custom_call.1} parent=23 // pred_region
          %s278 = scalar_lea.vmem %s2, %s273
          %v279 = vld [vmem:[%s278] sm:$0xff]
          %s280 = scalar_lea.vmem %s120, 8 [#allocation5]
          %vm281 = vcmask 261120
          %282 = vst.msk [vmem:[%s280] sm:$0xff] %vm281, %v279
        $region36: #{tpu_custom_call.1} parent=23 // pred_fallthru
          _
        %p283 = scmp.ne.s32.totalorder %s264, 1
        // Predicated region
        $region37: #{tpu_custom_call.1} parent=23 // pred_check
          %p284 = pneg %p283
        $region38: #{tpu_custom_call.1} parent=23 // pred_check_branch
          %286 = sbr.rel (%p284) target = $region40
        $region39: #{tpu_custom_call.1} parent=23 // pred_region
          %s287 = sld [smem:[#allocation3 + %s272]]
          %s288 = scalar_lea.vmem %s2, %s287
          %v289 = vld [vmem:[%s288] sm:$0x1]
          %s290 = scalar_lea.vmem %s120, 8 [#allocation5]
          %vm291 = vcmask 253952
          %292 = vst.msk [vmem:[%s290] sm:$0x1] %vm291, %v289
          %s293 = sadd.s32 %s265, 1
          %s294 = sshra.s32 %s293, 7
          %s295 = sand.u32 %s293, 127
          %s296 = sadd.s32 %s294, %s31
          %s297 = smul.u32 %s296, 128
          %s298 = sshra.s32 %s293, 7
          %s299 = sand.u32 %s293, 127
          %s300 = sadd.s32 %s297, %s299
          %s301 = sld [smem:[#allocation3 + %s300]]
          %s302 = scalar_lea.vmem %s2, %s301
          %v303 = vld [vmem:[%s302] sm:$0x1]
          %s304 = sadd.s32 8, 1
          %s305 = scalar_lea.vmem %s120, %s304 [#allocation5]
          %306 = vst.msk [vmem:[%s305] sm:$0x1] %vm291, %v303
          %s307 = sadd.s32 %s265, 2
          %s308 = sshra.s32 %s307, 7
          %s309 = sand.u32 %s307, 127
          %s310 = sadd.s32 %s308, %s31
          %s311 = smul.u32 %s310, 128
          %s312 = sshra.s32 %s307, 7
          %s313 = sand.u32 %s307, 127
          %s314 = sadd.s32 %s311, %s313
          %s315 = sld [smem:[#allocation3 + %s314]]
          %s316 = scalar_lea.vmem %s2, %s315
          %v317 = vld [vmem:[%s316] sm:$0x1]
          %s318 = sadd.s32 8, 2
          %s319 = scalar_lea.vmem %s120, %s318 [#allocation5]
          %320 = vst.msk [vmem:[%s319] sm:$0x1] %vm291, %v317
          %s321 = sadd.s32 %s265, 3
          %s322 = sshra.s32 %s321, 7
          %s323 = sand.u32 %s321, 127
          %s324 = sadd.s32 %s322, %s31
          %s325 = smul.u32 %s324, 128
          %s326 = sshra.s32 %s321, 7
          %s327 = sand.u32 %s321, 127
          %s328 = sadd.s32 %s325, %s327
          %s329 = sld [smem:[#allocation3 + %s328]]
          %s330 = scalar_lea.vmem %s2, %s329
          %v331 = vld [vmem:[%s330] sm:$0x1]
          %s332 = sadd.s32 8, 3
          %s333 = scalar_lea.vmem %s120, %s332 [#allocation5]
          %334 = vst.msk [vmem:[%s333] sm:$0x1] %vm291, %v331
          %s335 = sadd.s32 %s265, 4
          %s336 = sshra.s32 %s335, 7
          %s337 = sand.u32 %s335, 127
          %s338 = sadd.s32 %s336, %s31
          %s339 = smul.u32 %s338, 128
          %s340 = sshra.s32 %s335, 7
          %s341 = sand.u32 %s335, 127
          %s342 = sadd.s32 %s339, %s341
          %s343 = sld [smem:[#allocation3 + %s342]]
          %s344 = scalar_lea.vmem %s2, %s343
          %v345 = vld [vmem:[%s344] sm:$0x1]
          %s346 = sadd.s32 8, 4
          %s347 = scalar_lea.vmem %s120, %s346 [#allocation5]
          %348 = vst.msk [vmem:[%s347] sm:$0x1] %vm291, %v345
          %s349 = sadd.s32 %s265, 5
          %s350 = sshra.s32 %s349, 7
          %s351 = sand.u32 %s349, 127
          %s352 = sadd.s32 %s350, %s31
          %s353 = smul.u32 %s352, 128
          %s354 = sshra.s32 %s349, 7
          %s355 = sand.u32 %s349, 127
          %s356 = sadd.s32 %s353, %s355
          %s357 = sld [smem:[#allocation3 + %s356]]
          %s358 = scalar_lea.vmem %s2, %s357
          %v359 = vld [vmem:[%s358] sm:$0x1]
          %s360 = sadd.s32 8, 5
          %s361 = scalar_lea.vmem %s120, %s360 [#allocation5]
          %362 = vst.msk [vmem:[%s361] sm:$0x1] %vm291, %v359
          %s363 = sadd.s32 %s265, 6
          %s364 = sshra.s32 %s363, 7
          %s365 = sand.u32 %s363, 127
          %s366 = sadd.s32 %s364, %s31
          %s367 = smul.u32 %s366, 128
          %s368 = sshra.s32 %s363, 7
          %s369 = sand.u32 %s363, 127
          %s370 = sadd.s32 %s367, %s369
          %s371 = sld [smem:[#allocation3 + %s370]]
          %s372 = scalar_lea.vmem %s2, %s371
          %v373 = vld [vmem:[%s372] sm:$0x1]
          %s374 = sadd.s32 8, 6
          %s375 = scalar_lea.vmem %s120, %s374 [#allocation5]
          %376 = vst.msk [vmem:[%s375] sm:$0x1] %vm291, %v373
          %s377 = sadd.s32 %s265, 7
          %s378 = sshra.s32 %s377, 7
          %s379 = sand.u32 %s377, 127
          %s380 = sadd.s32 %s378, %s31
          %s381 = smul.u32 %s380, 128
          %s382 = sshra.s32 %s377, 7
          %s383 = sand.u32 %s377, 127
          %s384 = sadd.s32 %s381, %s383
          %s385 = sld [smem:[#allocation3 + %s384]]
          %s386 = scalar_lea.vmem %s2, %s385
          %v387 = vld [vmem:[%s386] sm:$0x1]
          %s388 = sadd.s32 8, 7
          %s389 = scalar_lea.vmem %s120, %s388 [#allocation5]
          %390 = vst.msk [vmem:[%s389] sm:$0x1] %vm291, %v387
        $region40: #{tpu_custom_call.1} parent=23 // pred_fallthru
          _
        %s391 = sand.u32 %s70, 1
        %s392 = scalar_lea.sflag [#allocation6], %s391
        %s393 = sand.u32 %s70, 1
        %s394 = smul.addr %s393, 16
        %s395 = scalar_lea.vmem [#allocation5], %s394
        // Predicated region
        $region41: #{tpu_custom_call.1} parent=23 // pred_check
          %p396 = pneg %p80
        $region42: #{tpu_custom_call.1} parent=23 // pred_check_branch
          %398 = sbr.rel (%p396) target = $region44
        $region43: #{tpu_custom_call.1} parent=23 // pred_region
          %s399 = smul.u32 2, %s32
          %s401 = ssub.s32 256, 256
          %402 = vsyncadd %s392, %s401
          %s403 = smul.addr %s31, 2
          %s404 = sadd.s32 %s399, %s403
          %s405 = smul.addr %s404, 128
          %s406 = scalar_lea.hbm %s3, %s405
          %s407 = sshll.u32 %s395, 4
          %s408 = int_to_ptr.vmem [resolvable:$true] %s407
          %413 = dma.vmem_to_hbm [thread:$0]  %s408, 256, %s406, %s392, 128, 128, 8
        $region44: #{tpu_custom_call.1} parent=23 // pred_fallthru
          _
      $region24: #{tpu_custom_call.1} parent=5 // pred_fallthru
        _
      %p414 = scmp.le.s32.totalorder 2, %s22
      // Predicated region
      $region45: #{tpu_custom_call.1} parent=5 // pred_check
        %p415 = pneg %p414
      $region46: #{tpu_custom_call.1} parent=5 // pred_check_branch
        %417 = sbr.rel (%p415) target = $region48
      $region47: #{tpu_custom_call.1} parent=5 // pred_region
        %s418 = ssub.s32 %s22, 2
        // Predicated region
        $region49: #{tpu_custom_call.1} parent=47 // pred_check
          %p419 = pneg %p86
        $region50: #{tpu_custom_call.1} parent=47 // pred_check_branch
          %421 = sbr.rel (%p419) target = $region52
        $region51: #{tpu_custom_call.1} parent=47 // pred_region
          %s422 = sand.u32 %s71, 1
          %s423 = scalar_lea.sflag [#allocation6], %s422
          %s424 = sand.u32 %s71, 1
          %s425 = smul.addr %s424, 16
          %s426 = scalar_lea.vmem [#allocation5], %s425
          %427 = dma.done %s423, 256
        $region52: #{tpu_custom_call.1} parent=47 // pred_fallthru
          _
      $region48: #{tpu_custom_call.1} parent=5 // pred_fallthru
        _
    $region6: #{tpu_custom_call.1} parent=1 // loop_footer
      %s26 = sadd.s32 1, %s22
    $region7: #{tpu_custom_call.1} parent=1 // loop_footer_branch
      %21 = sbr.rel target = $region3
    $region8: #{tpu_custom_call.1} parent=1 // loop_exit
      _
    %428 = vsyncpa [#allocation6], 1
    %s429 = scalar_lea.sflag [#allocation6], 1
    %430 = vsyncpa %s429, 1

// kernel: tpu_custom_call.1
$region0: #{tpu_custom_call.1}
  #allocation0 [shape = 'u32[]', space=smem, size = 0x4, offset = 0x4, fixed_abs, tag = 'smem constant byte address 0x4 - core index']
  #allocation1 [shape = 'u32[144,128]{1,0:T(1,128)}', space=vmem, size = 0x12000, scoped, tag = 'internal scratch']
  #allocation2 [shape = 's32[1]{0}', space=sflag, size = 0x4, scoped, tag = 'scoped memory for tpu_custom_call.1']
  #allocation3 [shape = 'u8[1024]{0}', space=smem, size = 0x400, scoped, tag = 'prefetched SMEM operand 0']
  #allocation4 [shape = 'u8[1024]{0}', space=smem, size = 0x400, scoped, tag = 'prefetched SMEM operand 1']
  %s0 = inlined_call_operand.vmem [shape: s32[2,16], index: 0, kind: input, shape index: {}]
  %s1 = inlined_call_operand.vmem [shape: s32[2,2], index: 1, kind: input, shape index: {}]
  %s2 = inlined_call_operand.vmem [shape: f32[64,32], index: 2, kind: input, shape index: {}]
  %s3 = inlined_call_operand.hbm [shape: f32[2,16,32], index: 3, kind: output, shape index: {}]
  %s4 = sld [smem:[#allocation0]]
  $region53: #{tpu_custom_call.1} parent=0
    _
  %s6 = ssub.s32 1, %s4
  %s7 = scalar_select 0, %s6, %s4
  %s8 = sshll.u32 %s0, 4
  %s9 = int_to_ptr.vmem [resolvable:$true] %s8
  %11 = dma.vmem_to_smem %s9, 32, [#allocation3], [#allocation2]
  %s12 = sshll.u32 %s1, 4
  %s13 = int_to_ptr.vmem [resolvable:$true] %s12
  %15 = dma.vmem_to_smem %s13, 32, [#allocation4], [#allocation2]
  %16 = dma.done [#allocation2], 64
  %17 = sfence
  $region1: #{tpu_custom_call.1} parent=0
    #allocation5 [shape = 'u8[16384]{0}', space=vmem, size = 0x4000, scoped, tag = 'output window, operand 0']
    #allocation6 [shape = 's32[2]{0}', space=sflag, size = 0x8, scoped, tag = 'scoped memory for tpu_custom_call.1']
    %18 = vsyncpa [#allocation6], 0
    %s19 = scalar_lea.sflag [#allocation6], 1
    %20 = vsyncpa %s19, 0
    loop: start=0, step=1, limit=4
    $region2: #{tpu_custom_call.1} parent=1 // loop_pre_header
      _
    $region3: #{tpu_custom_call.1} parent=1 // loop_header
      %s22 = sphi 0, %s26
      %p23 = scmp.ge.s32.totalorder %s22, 4
      %s29 = sphi 0, %s41
      %s30 = sphi 0, %s37
      %s31 = sphi 0, %s29
      %s32 = sphi 0, %s30
      %s33 = sphi 0, %s31
      %s34 = sphi 0, %s32
      %s42 = sphi 0, %s42
      %s44 = sphi 0, %s42
      %s45 = sphi 0, %s44
      %s59 = sphi 0, %s45
      %s67 = sphi 0, %s69
      %s70 = sphi 0, %s67
      %s71 = sphi 0, %s70
      %s87 = sphi 0, %s71
    $region4: #{tpu_custom_call.1} parent=1 // loop_header_branch
      %25 = sbr.rel (%p23) target = $region8
    $region5: #{tpu_custom_call.1} parent=1 // loop_body
      %s27 = ssub.s32 %s22, 1
      %s28 = ssub.s32 %s22, 2
      %s35 = sadd.s32 1, %s30
      %p36 = scmp.ge.s32.totalorder %s35, 1
      %s37 = scalar_select %p36, 0, %s35
      %s38 = sadd.s32 1, %s29
      %s39 = scalar_select %p36, %s38, %s29
      %p40 = scmp.ge.s32.totalorder %s39, 2
      %s41 = scalar_select %p40, 0, %s39
      %s43 = sadd.s32 %s42, 1
      %p46 = scmp.eq.s32.totalorder %s22, 1
      %p47 = scmp.ne.s32.totalorder %s42, %s44
      %p48 = scmp.eq.s32.totalorder %s22, 0
      %p49 = por %p47, %p48
      %p50 = scmp.ne.s32.totalorder %s42, %s44
      %p51 = scmp.eq.s32.totalorder %s27, 1
      %p52 = por %p50, %p51
      %p53 = scmp.ne.s32.totalorder %s44, %s45
      %p54 = scmp.eq.s32.totalorder %s27, 0
      %p55 = por %p53, %p54
      %p56 = scmp.ne.s32.totalorder %s44, %s45
      %p57 = scmp.eq.s32.totalorder %s28, 1
      %p58 = por %p56, %p57
      %p60 = scmp.ne.s32.totalorder %s45, %s59
      %p61 = scmp.eq.s32.totalorder %s28, 0
      %p62 = por %p60, %p61
      %s63 = ssub.s32 %s29, %s41
      %s64 = ssub.s32 %s30, %s37
      %s65 = sor.u32 %s63, %s64
      %p66 = scmp.eq.s32.totalorder %s65, 0
      %s68 = sadd.s32 %s67, 1
      %s69 = scalar_select %p66, %s67, %s68
      %p72 = pneg %p66
      %p73 = scmp.eq.s32.totalorder %s22, 1
      %p74 = por %p72, %p73
      %p75 = scmp.ne.s32.totalorder %s67, %s70
      %p76 = scmp.eq.s32.totalorder %s22, 0
      %p77 = por %p75, %p76
      %p78 = scmp.ne.s32.totalorder %s67, %s70
      %p79 = scmp.eq.s32.totalorder %s27, 1
      %p80 = por %p78, %p79
      %p81 = scmp.ne.s32.totalorder %s70, %s71
      %p82 = scmp.eq.s32.totalorder %s27, 0
      %p83 = por %p81, %p82
      %p84 = scmp.ne.s32.totalorder %s70, %s71
      %p85 = scmp.eq.s32.totalorder %s28, 1
      %p86 = por %p84, %p85
      %p88 = scmp.ne.s32.totalorder %s71, %s87
      %p89 = scmp.eq.s32.totalorder %s28, 0
      %p90 = por %p88, %p89
      %p91 = scmp.le.s32.totalorder 1, %s22
      %p92 = scmp.lt.s32.totalorder %s22, 3
      %p93 = pnand %p91, %p92
      %p94 = pneg %p93
      // Predicated region
      $region9: #{tpu_custom_call.1} parent=5 // pred_check
        _
      $region10: #{tpu_custom_call.1} parent=5 // pred_check_branch
        %96 = sbr.rel (%p93) target = $region12
      $region11: #{tpu_custom_call.1} parent=5 // pred_region
        %s97 = ssub.s32 %s22, 1
        // Predicated region
        $region13: #{tpu_custom_call.1} parent=11 // pred_check
          %p98 = pneg %p55
        $region14: #{tpu_custom_call.1} parent=11 // pred_check_branch
          %100 = sbr.rel (%p98) target = $region16
        $region15: #{tpu_custom_call.1} parent=11 // pred_region
          _
        $region16: #{tpu_custom_call.1} parent=11 // pred_fallthru
          _
      $region12: #{tpu_custom_call.1} parent=5 // pred_fallthru
        _
      %p101 = scmp.lt.s32.totalorder %s22, 2
      // Predicated region
      $region17: #{tpu_custom_call.1} parent=5 // pred_check
        %p102 = pneg %p101
      $region18: #{tpu_custom_call.1} parent=5 // pred_check_branch
        %104 = sbr.rel (%p102) target = $region20
      $region19: #{tpu_custom_call.1} parent=5 // pred_region
        _
      $region20: #{tpu_custom_call.1} parent=5 // pred_fallthru
        _
      %p105 = scmp.le.s32.totalorder 1, %s22
      %p106 = scmp.lt.s32.totalorder %s22, 3
      %p107 = pnand %p105, %p106
      %p108 = pneg %p107
      // Predicated region
      $region21: #{tpu_custom_call.1} parent=5 // pred_check
        _
      $region22: #{tpu_custom_call.1} parent=5 // pred_check_branch
        %110 = sbr.rel (%p107) target = $region24
      $region23: #{tpu_custom_call.1} parent=5 // pred_region
        %s111 = ssub.s32 %s22, 1
        %p112 = pneg %p55
        %p113 = pneg %p52
        %p114 = pneg %p83
        %p115 = pneg %p80
        %s116 = sand.u32 %s70, 1
        %s117 = scalar_lea.sflag [#allocation6], %s116
        %s118 = sand.u32 %s70, 1
        %s119 = smul.addr %s118, 16
        %s120 = scalar_lea.vmem [#allocation5], %s119
        %s121 = smul.u32 2, %s32
        %s122 = smul.u32 %s32, 16
        %s123 = smul.u32 %s32, 2
        %s124 = sshra.s32 %s123, 7
        %s125 = sand.u32 %s123, 127
        %s126 = sadd.s32 %s124, %s31
        %s127 = smul.u32 %s126, 128
        %s128 = sshra.s32 %s123, 7
        %s129 = sand.u32 %s123, 127
        %s130 = sadd.s32 %s127, %s129
        %s131 = sld [smem:[#allocation4 + %s130]]
        %s132 = sadd.s32 %s122, 0
        %s133 = sshra.s32 %s132, 7
        %s134 = sand.u32 %s132, 127
        %s135 = sadd.s32 %s133, %s31
        %s136 = smul.u32 %s135, 128
        %s137 = sshra.s32 %s132, 7
        %s138 = sand.u32 %s132, 127
        %s139 = sadd.s32 %s136, %s138
        %s140 = sld [smem:[#allocation3 + %s139]]
        %p141 = scmp.eq.s32.totalorder %s131, 1
        // Predicated region
        $region25: #{tpu_custom_call.1} parent=23 // pred_check
          %p142 = pneg %p141
        $region26: #{tpu_custom_call.1} parent=23 // pred_check_branch
          %144 = sbr.rel (%p142) target = $region28
        $region27: #{tpu_custom_call.1} parent=23 // pred_region
          %s145 = scalar_lea.vmem %s2, %s140
          %v146 = vld [vmem:[%s145] sm:$0xff]
          %vm147 = vcmask 261120
          %148 = vst.msk [vmem:[%s120] sm:$0xff] %vm147, %v146
        $region28: #{tpu_custom_call.1} parent=23 // pred_fallthru
          _
        %p149 = scmp.ne.s32.totalorder %s131, 1
        // Predicated region
        $region29: #{tpu_custom_call.1} parent=23 // pred_check
          %p150 = pneg %p149
        $region30: #{tpu_custom_call.1} parent=23 // pred_check_branch
          %152 = sbr.rel (%p150) target = $region32
        $region31: #{tpu_custom_call.1} parent=23 // pred_region
          %s153 = sld [smem:[#allocation3 + %s139]]
          %s154 = scalar_lea.vmem %s2, %s153
          %v155 = vld [vmem:[%s154] sm:$0x1]
          %vm156 = vcmask 253952
          %157 = vst.msk [vmem:[%s120] sm:$0x1] %vm156, %v155
          %s158 = sadd.s32 %s132, 1
          %s159 = sshra.s32 %s158, 7
          %s160 = sand.u32 %s158, 127
          %s161 = sadd.s32 %s159, %s31
          %s162 = smul.u32 %s161, 128
          %s163 = sshra.s32 %s158, 7
          %s164 = sand.u32 %s158, 127
          %s165 = sadd.s32 %s162, %s164
          %s166 = sld [smem:[#allocation3 + %s165]]
          %s167 = scalar_lea.vmem %s2, %s166
          %v168 = vld [vmem:[%s167] sm:$0x1]
          %s169 = sadd.s32 0, 1
          %s170 = scalar_lea.vmem %s120, %s169 [#allocation5]
          %171 = vst.msk [vmem:[%s170] sm:$0x1] %vm156, %v168
          %s172 = sadd.s32 %s132, 2
          %s173 = sshra.s32 %s172, 7
          %s174 = sand.u32 %s172, 127
          %s175 = sadd.s32 %s173, %s31
          %s176 = smul.u32 %s175, 128
          %s177 = sshra.s32 %s172, 7
          %s178 = sand.u32 %s172, 127
          %s179 = sadd.s32 %s176, %s178
          %s180 = sld [smem:[#allocation3 + %s179]]
          %s181 = scalar_lea.vmem %s2, %s180
          %v182 = vld [vmem:[%s181] sm:$0x1]
          %s183 = sadd.s32 0, 2
          %s184 = scalar_lea.vmem %s120, %s183 [#allocation5]
          %185 = vst.msk [vmem:[%s184] sm:$0x1] %vm156, %v182
          %s186 = sadd.s32 %s132, 3
          %s187 = sshra.s32 %s186, 7
          %s188 = sand.u32 %s186, 127
          %s189 = sadd.s32 %s187, %s31
          %s190 = smul.u32 %s189, 128
          %s191 = sshra.s32 %s186, 7
          %s192 = sand.u32 %s186, 127
          %s193 = sadd.s32 %s190, %s192
          %s194 = sld [smem:[#allocation3 + %s193]]
          %s195 = scalar_lea.vmem %s2, %s194
          %v196 = vld [vmem:[%s195] sm:$0x1]
          %s197 = sadd.s32 0, 3
          %s198 = scalar_lea.vmem %s120, %s197 [#allocation5]
          %199 = vst.msk [vmem:[%s198] sm:$0x1] %vm156, %v196
          %s200 = sadd.s32 %s132, 4
          %s201 = sshra.s32 %s200, 7
          %s202 = sand.u32 %s200, 127
          %s203 = sadd.s32 %s201, %s31
          %s204 = smul.u32 %s203, 128
          %s205 = sshra.s32 %s200, 7
          %s206 = sand.u32 %s200, 127
          %s207 = sadd.s32 %s204, %s206
          %s208 = sld [smem:[#allocation3 + %s207]]
          %s209 = scalar_lea.vmem %s2, %s208
          %v210 = vld [vmem:[%s209] sm:$0x1]
          %s211 = sadd.s32 0, 4
          %s212 = scalar_lea.vmem %s120, %s211 [#allocation5]
          %213 = vst.msk [vmem:[%s212] sm:$0x1] %vm156, %v210
          %s214 = sadd.s32 %s132, 5
          %s215 = sshra.s32 %s214, 7
          %s216 = sand.u32 %s214, 127
          %s217 = sadd.s32 %s215, %s31
          %s218 = smul.u32 %s217, 128
          %s219 = sshra.s32 %s214, 7
          %s220 = sand.u32 %s214, 127
          %s221 = sadd.s32 %s218, %s220
          %s222 = sld [smem:[#allocation3 + %s221]]
          %s223 = scalar_lea.vmem %s2, %s222
          %v224 = vld [vmem:[%s223] sm:$0x1]
          %s225 = sadd.s32 0, 5
          %s226 = scalar_lea.vmem %s120, %s225 [#allocation5]
          %227 = vst.msk [vmem:[%s226] sm:$0x1] %vm156, %v224
          %s228 = sadd.s32 %s132, 6
          %s229 = sshra.s32 %s228, 7
          %s230 = sand.u32 %s228, 127
          %s231 = sadd.s32 %s229, %s31
          %s232 = smul.u32 %s231, 128
          %s233 = sshra.s32 %s228, 7
          %s234 = sand.u32 %s228, 127
          %s235 = sadd.s32 %s232, %s234
          %s236 = sld [smem:[#allocation3 + %s235]]
          %s237 = scalar_lea.vmem %s2, %s236
          %v238 = vld [vmem:[%s237] sm:$0x1]
          %s239 = sadd.s32 0, 6
          %s240 = scalar_lea.vmem %s120, %s239 [#allocation5]
          %241 = vst.msk [vmem:[%s240] sm:$0x1] %vm156, %v238
          %s242 = sadd.s32 %s132, 7
          %s243 = sshra.s32 %s242, 7
          %s244 = sand.u32 %s242, 127
          %s245 = sadd.s32 %s243, %s31
          %s246 = smul.u32 %s245, 128
          %s247 = sshra.s32 %s242, 7
          %s248 = sand.u32 %s242, 127
          %s249 = sadd.s32 %s246, %s248
          %s250 = sld [smem:[#allocation3 + %s249]]
          %s251 = scalar_lea.vmem %s2, %s250
          %v252 = vld [vmem:[%s251] sm:$0x1]
          %s253 = sadd.s32 0, 7
          %s254 = scalar_lea.vmem %s120, %s253 [#allocation5]
          %255 = vst.msk [vmem:[%s254] sm:$0x1] %vm156, %v252
        $region32: #{tpu_custom_call.1} parent=23 // pred_fallthru
          _
        %s256 = sadd.s32 %s123, 1
        %s257 = sshra.s32 %s256, 7
        %s258 = sand.u32 %s256, 127
        %s259 = sadd.s32 %s257, %s31
        %s260 = smul.u32 %s259, 128
        %s261 = sshra.s32 %s256, 7
        %s262 = sand.u32 %s256, 127
        %s263 = sadd.s32 %s260, %s262
        %s264 = sld [smem:[#allocation4 + %s263]]
        %s265 = sadd.s32 %s122, 8
        %s266 = sshra.s32 %s265, 7
        %s267 = sand.u32 %s265, 127
        %s268 = sadd.s32 %s266, %s31
        %s269 = smul.u32 %s268, 128
        %s270 = sshra.s32 %s265, 7
        %s271 = sand.u32 %s265, 127
        %s272 = sadd.s32 %s269, %s271
        %s273 = sld [smem:[#allocation3 + %s272]]
        %p274 = scmp.eq.s32.totalorder %s264, 1
        // Predicated region
        $region33: #{tpu_custom_call.1} parent=23 // pred_check
          %p275 = pneg %p274
        $region34: #{tpu_custom_call.1} parent=23 // pred_check_branch
          %277 = sbr.rel (%p275) target = $region36
        $region35: #{tpu_custom_call.1} parent=23 // pred_region
          %s278 = scalar_lea.vmem %s2, %s273
          %v279 = vld [vmem:[%s278] sm:$0xff]
          %s280 = scalar_lea.vmem %s120, 8 [#allocation5]
          %vm281 = vcmask 261120
          %282 = vst.msk [vmem:[%s280] sm:$0xff] %vm281, %v279
        $region36: #{tpu_custom_call.1} parent=23 // pred_fallthru
          _
        %p283 = scmp.ne.s32.totalorder %s264, 1
        // Predicated region
        $region37: #{tpu_custom_call.1} parent=23 // pred_check
          %p284 = pneg %p283
        $region38: #{tpu_custom_call.1} parent=23 // pred_check_branch
          %286 = sbr.rel (%p284) target = $region40
        $region39: #{tpu_custom_call.1} parent=23 // pred_region
          %s287 = sld [smem:[#allocation3 + %s272]]
          %s288 = scalar_lea.vmem %s2, %s287
          %v289 = vld [vmem:[%s288] sm:$0x1]
          %s290 = scalar_lea.vmem %s120, 8 [#allocation5]
          %vm291 = vcmask 253952
          %292 = vst.msk [vmem:[%s290] sm:$0x1] %vm291, %v289
          %s293 = sadd.s32 %s265, 1
          %s294 = sshra.s32 %s293, 7
          %s295 = sand.u32 %s293, 127
          %s296 = sadd.s32 %s294, %s31
          %s297 = smul.u32 %s296, 128
          %s298 = sshra.s32 %s293, 7
          %s299 = sand.u32 %s293, 127
          %s300 = sadd.s32 %s297, %s299
          %s301 = sld [smem:[#allocation3 + %s300]]
          %s302 = scalar_lea.vmem %s2, %s301
          %v303 = vld [vmem:[%s302] sm:$0x1]
          %s304 = sadd.s32 8, 1
          %s305 = scalar_lea.vmem %s120, %s304 [#allocation5]
          %306 = vst.msk [vmem:[%s305] sm:$0x1] %vm291, %v303
          %s307 = sadd.s32 %s265, 2
          %s308 = sshra.s32 %s307, 7
          %s309 = sand.u32 %s307, 127
          %s310 = sadd.s32 %s308, %s31
          %s311 = smul.u32 %s310, 128
          %s312 = sshra.s32 %s307, 7
          %s313 = sand.u32 %s307, 127
          %s314 = sadd.s32 %s311, %s313
          %s315 = sld [smem:[#allocation3 + %s314]]
          %s316 = scalar_lea.vmem %s2, %s315
          %v317 = vld [vmem:[%s316] sm:$0x1]
          %s318 = sadd.s32 8, 2
          %s319 = scalar_lea.vmem %s120, %s318 [#allocation5]
          %320 = vst.msk [vmem:[%s319] sm:$0x1] %vm291, %v317
          %s321 = sadd.s32 %s265, 3
          %s322 = sshra.s32 %s321, 7
          %s323 = sand.u32 %s321, 127
          %s324 = sadd.s32 %s322, %s31
          %s325 = smul.u32 %s324, 128
          %s326 = sshra.s32 %s321, 7
          %s327 = sand.u32 %s321, 127
          %s328 = sadd.s32 %s325, %s327
          %s329 = sld [smem:[#allocation3 + %s328]]
          %s330 = scalar_lea.vmem %s2, %s329
          %v331 = vld [vmem:[%s330] sm:$0x1]
          %s332 = sadd.s32 8, 3
          %s333 = scalar_lea.vmem %s120, %s332 [#allocation5]
          %334 = vst.msk [vmem:[%s333] sm:$0x1] %vm291, %v331
          %s335 = sadd.s32 %s265, 4
          %s336 = sshra.s32 %s335, 7
          %s337 = sand.u32 %s335, 127
          %s338 = sadd.s32 %s336, %s31
          %s339 = smul.u32 %s338, 128
          %s340 = sshra.s32 %s335, 7
          %s341 = sand.u32 %s335, 127
          %s342 = sadd.s32 %s339, %s341
          %s343 = sld [smem:[#allocation3 + %s342]]
          %s344 = scalar_lea.vmem %s2, %s343
          %v345 = vld [vmem:[%s344] sm:$0x1]
          %s346 = sadd.s32 8, 4
          %s347 = scalar_lea.vmem %s120, %s346 [#allocation5]
          %348 = vst.msk [vmem:[%s347] sm:$0x1] %vm291, %v345
          %s349 = sadd.s32 %s265, 5
          %s350 = sshra.s32 %s349, 7
          %s351 = sand.u32 %s349, 127
          %s352 = sadd.s32 %s350, %s31
          %s353 = smul.u32 %s352, 128
          %s354 = sshra.s32 %s349, 7
          %s355 = sand.u32 %s349, 127
          %s356 = sadd.s32 %s353, %s355
          %s357 = sld [smem:[#allocation3 + %s356]]
          %s358 = scalar_lea.vmem %s2, %s357
          %v359 = vld [vmem:[%s358] sm:$0x1]
          %s360 = sadd.s32 8, 5
          %s361 = scalar_lea.vmem %s120, %s360 [#allocation5]
          %362 = vst.msk [vmem:[%s361] sm:$0x1] %vm291, %v359
          %s363 = sadd.s32 %s265, 6
          %s364 = sshra.s32 %s363, 7
          %s365 = sand.u32 %s363, 127
          %s366 = sadd.s32 %s364, %s31
          %s367 = smul.u32 %s366, 128
          %s368 = sshra.s32 %s363, 7
          %s369 = sand.u32 %s363, 127
          %s370 = sadd.s32 %s367, %s369
          %s371 = sld [smem:[#allocation3 + %s370]]
          %s372 = scalar_lea.vmem %s2, %s371
          %v373 = vld [vmem:[%s372] sm:$0x1]
          %s374 = sadd.s32 8, 6
          %s375 = scalar_lea.vmem %s120, %s374 [#allocation5]
          %376 = vst.msk [vmem:[%s375] sm:$0x1] %vm291, %v373
          %s377 = sadd.s32 %s265, 7
          %s378 = sshra.s32 %s377, 7
          %s379 = sand.u32 %s377, 127
          %s380 = sadd.s32 %s378, %s31
          %s381 = smul.u32 %s380, 128
          %s382 = sshra.s32 %s377, 7
          %s383 = sand.u32 %s377, 127
          %s384 = sadd.s32 %s381, %s383
          %s385 = sld [smem:[#allocation3 + %s384]]
          %s386 = scalar_lea.vmem %s2, %s385
          %v387 = vld [vmem:[%s386] sm:$0x1]
          %s388 = sadd.s32 8, 7
          %s389 = scalar_lea.vmem %s120, %s388 [#allocation5]
          %390 = vst.msk [vmem:[%s389] sm:$0x1] %vm291, %v387
        $region40: #{tpu_custom_call.1} parent=23 // pred_fallthru
          _
        %s391 = sand.u32 %s70, 1
        %s392 = scalar_lea.sflag [#allocation6], %s391
        %s393 = sand.u32 %s70, 1
        %s394 = smul.addr %s393, 16
        %s395 = scalar_lea.vmem [#allocation5], %s394
        // Predicated region
        $region41: #{tpu_custom_call.1} parent=23 // pred_check
          %p396 = pneg %p80
        $region42: #{tpu_custom_call.1} parent=23 // pred_check_branch
          %398 = sbr.rel (%p396) target = $region44
        $region43: #{tpu_custom_call.1} parent=23 // pred_region
          %s399 = smul.u32 2, %s32
          %s401 = ssub.s32 256, 256
          %402 = vsyncadd %s392, %s401
          %s403 = smul.addr %s31, 2
          %s404 = sadd.s32 %s399, %s403
          %s405 = smul.addr %s404, 128
          %s406 = scalar_lea.hbm %s3, %s405
          %s407 = sshll.u32 %s395, 4
          %s408 = int_to_ptr.vmem [resolvable:$true] %s407
          %413 = dma.vmem_to_hbm [thread:$0]  %s408, 256, %s406, %s392, 128, 128, 8
        $region44: #{tpu_custom_call.1} parent=23 // pred_fallthru
          _
      $region24: #{tpu_custom_call.1} parent=5 // pred_fallthru
        _
      %p414 = scmp.le.s32.totalorder 2, %s22
      // Predicated region
      $region45: #{tpu_custom_call.1} parent=5 // pred_check
        %p415 = pneg %p414
      $region46: #{tpu_custom_call.1} parent=5 // pred_check_branch
        %417 = sbr.rel (%p415) target = $region48
      $region47: #{tpu_custom_call.1} parent=5 // pred_region
        %s418 = ssub.s32 %s22, 2
        // Predicated region
        $region49: #{tpu_custom_call.1} parent=47 // pred_check
          %p419 = pneg %p86
        $region50: #{tpu_custom_call.1} parent=47 // pred_check_branch
          %421 = sbr.rel (%p419) target = $region52
        $region51: #{tpu_custom_call.1} parent=47 // pred_region
          %s422 = sand.u32 %s71, 1
          %s423 = scalar_lea.sflag [#allocation6], %s422
          %s424 = sand.u32 %s71, 1
          %s425 = smul.addr %s424, 16
          %s426 = scalar_lea.vmem [#allocation5], %s425
          %427 = dma.done %s423, 256
        $region52: #{tpu_custom_call.1} parent=47 // pred_fallthru
          _
      $region48: #{tpu_custom_call.1} parent=5 // pred_fallthru
        _
    $region6: #{tpu_custom_call.1} parent=1 // loop_footer
      %s26 = sadd.s32 1, %s22
    $region7: #{tpu_custom_call.1} parent=1 // loop_footer_branch
      %21 = sbr.rel target = $region3
    $region8: #{tpu_custom_call.1} parent=1 // loop_exit
      _
    %428 = vsyncpa [#allocation6], 1
    %s429 = scalar_lea.sflag [#allocation6], 1
    %430 = vsyncpa %s429, 1

</llo_original>
